<compile_context>
chip_gen: v5e
topology: v5e:2x2
jax: 0.10.0
libtpu: 0.0.40
codegen_flags: <defaults>
</compile_context>

<pallas_src>
import jax
import jax.numpy as jnp
from jax.experimental import pallas as pl
from jax.experimental.pallas import tpu as pltpu


def _round_up(x, m):
    return ((x + m - 1) // m) * m


# ---------------------------------------------------------------------------
# Fused Pallas forward:  DenseNet + conv_last + LN + TextCNN + LN + FC
# ---------------------------------------------------------------------------

def fused_forward(emb_out, mask, params, cfg):
    """emb_out: [B,S,E] f32, mask: [B,S] f32 (0/1)  ->  logits [B, label_size] f32."""
    B, S, E = emb_out.shape
    dk = cfg['densenet_kernels']
    depth, width = len(dk), len(dk[0])
    first_nf = cfg['densenet_first_num_filters']
    nf = cfg['densenet_num_filters']
    last_nf = cfg['densenet_last_num_filters']
    tnf = cfg['num_filters']
    tc_ks = list(cfg['kernel_sizes'])
    wf, bf = params['fc']
    label_size = bf.shape[0]

    k_max = max(max(kss) for kss in dk)
    # TODO(synk): 'same' padding matches PyTorch only for odd kernel sizes (true for this cfg).
    pad_max = (k_max - 1) // 2

    def in_ch(i):                       # per-column input channels of densenet block i
        return E if i == 0 else first_nf + nf * (i - 1)

    def out_ch(i):                      # per-column output channels of densenet block i
        return first_nf if i == 0 else nf

    c_in_max = in_ch(depth - 1)         # widest per-column input of any block
    cw = width * c_in_max               # chain-buffer lane width

    # ---- batch tiling: whole batch per step if B<=8, else tiles of 8 ("parallel") ----
    if B <= 8:
        bt, b_pad = B, B
    else:
        bt, b_pad = 8, _round_up(B, 8)
    grid_n = b_pad // bt
    stride = _round_up(S + 2 * pad_max, 8)      # per-element row stripe (sublane aligned)
    rows_blk = bt * stride                      # activation rows per grid step
    m_rows = rows_blk - 2 * pad_max             # conv-output rows per grid step

    # ---- striped activation layout (per-element pad rows, built once in the wrapper) ----
    emb_out = emb_out.astype(jnp.float32)
    mask = mask.astype(jnp.float32)
    if b_pad > B:
        emb_out = jnp.pad(emb_out, ((0, b_pad - B), (0, 0), (0, 0)))
        mask = jnp.pad(mask, ((0, b_pad - B), (0, 0)))
    emb_stripe = jnp.pad(emb_out, ((0, 0), (pad_max, stride - S - pad_max), (0, 0)))
    emb_stripe = emb_stripe.reshape(b_pad * stride, E)
    mask_stripe = jnp.pad(mask, ((0, 0), (pad_max, stride - S - pad_max)))
    mask_stripe = mask_stripe.reshape(b_pad * stride, 1)

    # ---- pack all parameters into a few lane-width-grouped, row-aligned blobs ----
    groups = {}        # lane width -> list of row-padded arrays
    seg_info = {}      # name       -> (lane width, row offset, rows)

    def pack(name, arr):
        arr = jnp.asarray(arr, jnp.float32)
        if arr.ndim == 1:
            arr = arr.reshape(1, -1)
        rows, cols = arr.shape
        g = groups.setdefault(cols, [])
        off = sum(int(a.shape[0]) for a in g)
        seg_info[name] = (cols, off, rows)
        pad_r = _round_up(rows, 8) - rows
        if pad_r:
            arr = jnp.pad(arr, ((0, pad_r), (0, 0)))
        g.append(arr)

    dense_tap_range = []
    for i in range(depth):
        ci, oc = in_ch(i), out_ch(i)
        cin_cols = E if i == 0 else cw
        w_merged = jnp.zeros((k_max, cin_cols, width * oc), jnp.float32)
        b_merged = []
        t_lo, t_hi = k_max, 0
        for j, (w, b) in enumerate(params['densenet_blocks'][i]):
            ks = w.shape[0]
            t0 = pad_max - (ks - 1) // 2            # center the ks taps inside k_max taps
            c0 = 0 if i == 0 else j * c_in_max      # block-diagonal for blocks >= 1
            w_merged = w_merged.at[t0:t0 + ks, c0:c0 + ci, j * oc:(j + 1) * oc].set(w)
            b_merged.append(b.reshape(1, oc))
            t_lo, t_hi = min(t_lo, t0), max(t_hi, t0 + ks)
        dense_tap_range.append((t_lo, t_hi))
        pack(f'dense{i}_w', w_merged.reshape(k_max * cin_cols, width * oc))
        pack(f'dense{i}_b', jnp.concatenate(b_merged, axis=-1))

    wl, bl = params['densenet_conv_last']          # [1, E + width*nf, last_nf]
    wl2 = wl.reshape(wl.shape[1], wl.shape[2])
    pack('convlast_wx', wl2[:E, :])                # partial-dot split: raw embedding part
    pack('convlast_wy', wl2[E:, :])                # partial-dot split: merged densenet part
    pack('convlast_b', bl)
    pack('ln1_g', params['ln_densenet'][0])
    pack('ln1_b', params['ln_densenet'][1])
    for c_, (w, b) in enumerate(params['textcnn_convs']):
        pack(f'tc{c_}_w', w.reshape(w.shape[0] * w.shape[1], w.shape[2]))
        pack(f'tc{c_}_b', b)
    pack('ln2_g', params['ln_textcnn'][0])
    pack('ln2_b', params['ln_textcnn'][1])
    pack('fc_w', wf)
    pack('fc_b', bf)

    blob_keys = sorted(groups)
    blobs = [jnp.concatenate(groups[k], axis=0) if len(groups[k]) > 1 else groups[k][0]
             for k in blob_keys]
    n_blobs = len(blobs)

    # ------------------------------- kernel ---------------------------------
    def kernel(*args):
        emb_ref, mask_ref = args[0], args[1]
        blob_refs = dict(zip(blob_keys, args[2:2 + n_blobs]))
        out_ref = args[2 + n_blobs]
        chain_ref = args[3 + n_blobs]

        def seg(name):                              # full packed segment (static row slice)
            cols, off, rows = seg_info[name]
            return blob_refs[cols][off:off + rows, :]

        def seg_rows(name, r0, nrows):              # row sub-slice of a packed segment
            cols, off, _ = seg_info[name]
            return blob_refs[cols][off + r0:off + r0 + nrows, :]

        # Pad rows of the chain scratch are never written -> zero only them (4 short rows).
        # Done every step (not pl.when(step==0)) so megacore grid splits stay correct.
        if pad_max > 0:
            chain_ref[0:pad_max, :] = jnp.zeros((pad_max, cw), jnp.float32)
            chain_ref[rows_blk - pad_max:rows_blk, :] = jnp.zeros((pad_max, cw), jnp.float32)

        m_win = mask_ref[pad_max:pad_max + m_rows, :]       # [M,1] 0/1 (0 on pad rows)
        _bm = {}

        def bmask(ncols):                                   # hoisted mask broadcasts
            if ncols not in _bm:
                _bm[ncols] = jnp.broadcast_to(m_win, (m_rows, ncols))
            return _bm[ncols]

        def layernorm(v, g, b, eps=1e-5):
            mu = jnp.mean(v, axis=-1, keepdims=True)
            var = jnp.mean(jnp.square(v - mu), axis=-1, keepdims=True)
            return (v - mu) * jax.lax.rsqrt(var + eps) * g + b

        # -------- DenseNet: width-merged blocks, tap-accumulating dots (no im2col) --------
        y = None
        for i in range(depth):
            src = emb_ref if i == 0 else chain_ref
            cin_cols = E if i == 0 else cw
            oc = out_ch(i)
            t_lo, t_hi = dense_tap_range[i]
            acc = jnp.zeros((m_rows, width * oc), jnp.float32)
            for t in range(t_lo, t_hi):
                acc = acc + jnp.dot(src[t:t + m_rows, :],
                                    seg_rows(f'dense{i}_w', t * cin_cols, cin_cols),
                                    preferred_element_type=jnp.float32)
            y = jnp.maximum(acc + seg(f'dense{i}_b'), 0.0) * bmask(width * oc)
            if i + 1 < depth:                       # stage into the channel-chain buffer
                ch_off = 0 if i == 0 else in_ch(i)
                if ch_off == 0 and oc == c_in_max:  # contiguous layout -> one full store
                    chain_ref[pad_max:pad_max + m_rows, :] = y
                else:
                    for j in range(width):
                        chain_ref[pad_max:pad_max + m_rows,
                                  j * c_in_max + ch_off:j * c_in_max + ch_off + oc] = \
                            y[:, j * oc:(j + 1) * oc]

        # -------- conv_last (kernel 1): two partial dots, no activation concat --------
        x_win = emb_ref[pad_max:pad_max + m_rows, :]
        z = (jnp.dot(x_win, seg('convlast_wx'), preferred_element_type=jnp.float32)
             + jnp.dot(y, seg('convlast_wy'), preferred_element_type=jnp.float32)
             + seg('convlast_b'))
        dn = jnp.maximum(z, 0.0) * bmask(last_nf)
        dn = layernorm(dn, seg('ln1_g'), seg('ln1_b'))

        # -------- TextCNN: valid conv (tap dots) + ReLU + per-element max pool --------
        pooled = []
        for c_, ks in enumerate(tc_ks):
            m_out = m_rows - ks + 1
            acc = jnp.zeros((m_out, tnf), jnp.float32)
            for t in range(ks):
                acc = acc + jnp.dot(dn[t:t + m_out, :],
                                    seg_rows(f'tc{c_}_w', t * last_nf, last_nf),
                                    preferred_element_type=jnp.float32)
            act = jnp.maximum(acc + seg(f'tc{c_}_b'), 0.0)
            per_b = [jnp.max(act[b * stride:b * stride + S - ks + 1, :],
                             axis=0, keepdims=True) for b in range(bt)]
            pooled.append(jnp.concatenate(per_b, axis=0) if bt > 1 else per_b[0])
        tc = jnp.concatenate(pooled, axis=-1) if len(pooled) > 1 else pooled[0]
        tc = layernorm(tc, seg('ln2_g'), seg('ln2_b'))

        # -------- FC head --------
        # TODO(synk): IsoMax head (use_isomax=True) not implemented; standard Linear is used.
        out_ref[...] = (jnp.dot(tc, seg('fc_w'), preferred_element_type=jnp.float32)
                        + seg('fc_b'))

    in_specs = [pl.BlockSpec((rows_blk, E), lambda g: (g, 0)),
                pl.BlockSpec((rows_blk, 1), lambda g: (g, 0))]
    in_specs += [pl.BlockSpec(b.shape, lambda g: (0, 0)) for b in blobs]

    out = pl.pallas_call(
        kernel,
        out_shape=jax.ShapeDtypeStruct((b_pad, label_size), jnp.float32),
        grid=(grid_n,),
        in_specs=in_specs,
        out_specs=pl.BlockSpec((bt, label_size), lambda g: (g, 0)),
        scratch_shapes=[pltpu.VMEM((rows_blk, cw), jnp.float32)],
        compiler_params=pltpu.CompilerParams(dimension_semantics=("parallel",)),
    )(emb_stripe, mask_stripe, *blobs)
    return out[:B]


# ---------------------------------------------------------------------------
# Pure-JAX reference (same math, no Pallas) for the correctness check
# ---------------------------------------------------------------------------

def ref_conv1d_mask_relu(x, w, bias, mask):
    B, S, _ = x.shape
    K = w.shape[0]
    pad = (K - 1) // 2
    xp = jnp.pad(x, ((0, 0), (pad, pad), (0, 0)))
    acc = sum(jnp.einsum('bsi,io->bso', xp[:, k:k + S, :], w[k]) for k in range(K))
    return jnp.maximum((acc + bias) * mask, 0.0)


def ref_conv1d_relu_maxpool(x, w, bias):
    B, S, _ = x.shape
    K = w.shape[0]
    s_out = S - K + 1
    acc = sum(jnp.einsum('bsi,io->bso', x[:, k:k + s_out, :], w[k]) for k in range(K))
    return jnp.max(jnp.maximum(acc + bias, 0.0), axis=1)


def ref_layernorm(x, gamma, beta, eps=1e-5):
    m = jnp.mean(x, axis=-1, keepdims=True)
    v = jnp.mean((x - m) ** 2, axis=-1, keepdims=True)
    return (x - m) / jnp.sqrt(v + eps) * gamma + beta


def ref_linear(x, w, bias):
    return x @ w + bias


# ---------------------------------------------------------------------------
# Model (parameter init + forward)
# ---------------------------------------------------------------------------

def init_params(key, cfg, vocab, emb_dim, label_size):
    def nrm(k, shape, scale=0.1):
        return scale * jax.random.normal(k, shape, jnp.float32)

    keys = iter(jax.random.split(key, 64))
    params = {}

    emb = nrm(next(keys), (vocab, emb_dim), 0.5)
    emb = emb.at[cfg['pad_token_id']].set(0.0)      # padding_idx row
    params['embedding'] = emb

    dk = cfg['densenet_kernels']
    first_nf = cfg['densenet_first_num_filters']
    nf = cfg['densenet_num_filters']
    last_nf = cfg['densenet_last_num_filters']
    width = len(dk[0])

    blocks = []
    for i, kss in enumerate(dk):
        in_ch = emb_dim if i == 0 else first_nf + nf * (i - 1)
        out_ch = first_nf if i == 0 else nf
        convs = []
        for ks in kss:
            convs.append((nrm(next(keys), (ks, in_ch, out_ch)),
                          nrm(next(keys), (out_ch,))))
        blocks.append(convs)
    params['densenet_blocks'] = blocks

    in_ch = emb_dim + nf * width
    params['densenet_conv_last'] = (nrm(next(keys), (1, in_ch, last_nf)),
                                    nrm(next(keys), (last_nf,)))
    params['ln_densenet'] = (jnp.ones((last_nf,), jnp.float32),
                             jnp.zeros((last_nf,), jnp.float32))

    tnf = cfg['num_filters']
    params['textcnn_convs'] = [(nrm(next(keys), (ks, last_nf, tnf)),
                                nrm(next(keys), (tnf,)))
                               for ks in cfg['kernel_sizes']]
    tc_dim = len(cfg['kernel_sizes']) * tnf
    params['ln_textcnn'] = (jnp.ones((tc_dim,), jnp.float32),
                            jnp.zeros((tc_dim,), jnp.float32))
    params['fc'] = (nrm(next(keys), (tc_dim, label_size)),
                    nrm(next(keys), (label_size,)))
    return params


def model_forward(token_ids, params, cfg, *, use_pallas=True):
    # mask = sign(abs(x)); dropout layers are identity at inference
    mask = (token_ids != 0).astype(jnp.float32)                    # [B,S]
    emb_out = params['embedding'][token_ids]                       # [B,S,E]

    if use_pallas:
        return fused_forward(emb_out, mask, params, cfg)

    # --- pure-JAX reference path ---
    mask3 = mask[:, :, None]
    dk = cfg['densenet_kernels']
    width = len(dk[0])
    merge = []
    for j in range(width):
        results = []
        for i in range(len(dk)):
            conv_in = emb_out if i == 0 else jnp.concatenate(results, axis=-1)
            w, b = params['densenet_blocks'][i][j]
            results.append(ref_conv1d_mask_relu(conv_in, w, b, mask3))
        merge.append(results[-1])
    cat = jnp.concatenate([emb_out] + merge, axis=-1)
    w, b = params['densenet_conv_last']
    dn_out = ref_conv1d_mask_relu(cat, w, b, mask3)                # [B,S,last_nf]
    g, bb = params['ln_densenet']
    dn_out = ref_layernorm(dn_out, g, bb)

    pooled = [ref_conv1d_relu_maxpool(dn_out, w_, b_) for (w_, b_) in params['textcnn_convs']]
    tc_out = jnp.concatenate(pooled, axis=-1)                      # [B, len(ks)*nf]
    g, bb = params['ln_textcnn']
    tc_out = ref_layernorm(tc_out, g, bb)

    w, b = params['fc']
    return ref_linear(tc_out, w, b)


# ---------------------------------------------------------------------------
# Main
# ---------------------------------------------------------------------------

if __name__ == "__main__":
    cfg = dict(
        n_ctx=8,
        token_emb_dim=32,
        pad_token_id=0,
        densenet_kernels=[[1, 3, 5], [1, 3, 5]],
        densenet_first_num_filters=16,
        densenet_num_filters=16,
        densenet_last_num_filters=32,
        num_filters=16,
        kernel_sizes=[2, 3],
        dropout=0.0,
    )
    B, S = 2, cfg['n_ctx']
    vocab, emb_dim = 20, cfg['token_emb_dim']
    label_size = 4

    key = jax.random.PRNGKey(0)
    k_tok, k_par = jax.random.split(key)
    token_ids = jax.random.randint(k_tok, (B, S), 1, vocab)
    token_ids = token_ids.at[0, -2:].set(0).at[1, -4:].set(0)      # padded positions

    params = init_params(k_par, cfg, vocab, emb_dim, label_size)

    fwd = jax.jit(lambda toks, prm: model_forward(toks, prm, cfg, use_pallas=True))
    out = jax.block_until_ready(fwd(token_ids, params))

    ref = model_forward(token_ids, params, cfg, use_pallas=False)
    assert out.shape == (B, label_size)
    assert bool(jnp.all(jnp.isfinite(out)))
    assert bool(jnp.allclose(out, ref, atol=5e-2, rtol=5e-2)), "Pallas vs JAX reference mismatch"
    print("KERNEL_OK")
</pallas_src>

<mosaic_0001>
module attributes {stable_mosaic.version = 11 : i64} {
  func.func @kernel(%arg0: i32, %arg1: memref<32x32xf32, #tpu.memory_space<vmem>>, %arg2: memref<32x1xf32, #tpu.memory_space<vmem>>, %arg3: memref<40x4xf32, #tpu.memory_space<vmem>>, %arg4: memref<176x16xf32, #tpu.memory_space<vmem>>, %arg5: memref<120x32xf32, #tpu.memory_space<vmem>>, %arg6: memref<416x48xf32, #tpu.memory_space<vmem>>, %arg7: memref<2x4xf32, #tpu.memory_space<vmem>>, %arg8: memref<32x48xf32, #tpu.memory_space<vmem>>) attributes {dimension_semantics = [#tpu.dimension_semantics<parallel>], iteration_bounds = array<i64: 1>, scalar_prefetch = 0 : i64, scratch_operands = 1 : i64, tpu.core_type = #tpu.core_type<tc>, window_params = [{transform_indices = @transform_0, window_bounds = array<i64: 32, 32>}, {transform_indices = @transform_1, window_bounds = array<i64: 32, 1>}, {pipeline_mode = #tpu.pipeline_mode<synchronous>, transform_indices = @transform_2, window_bounds = array<i64: 40, 4>}, {pipeline_mode = #tpu.pipeline_mode<synchronous>, transform_indices = @transform_3, window_bounds = array<i64: 176, 16>}, {pipeline_mode = #tpu.pipeline_mode<synchronous>, transform_indices = @transform_4, window_bounds = array<i64: 120, 32>}, {pipeline_mode = #tpu.pipeline_mode<synchronous>, transform_indices = @transform_5, window_bounds = array<i64: 416, 48>}, {transform_indices = @transform_6, window_bounds = array<i64: 2, 4>}]} {
    %cst = arith.constant 0.000000e+00 : f32
    %0 = vector.broadcast %cst : f32 to vector<2x48xf32>
    %c0 = arith.constant 0 : index
    %c0_0 = arith.constant 0 : index
    %1 = vector.load %arg8[%c0, %c0_0] : memref<32x48xf32, #tpu.memory_space<vmem>>, vector<2x48xf32>
    tpu.vector_store %arg8[%c0, %c0_0], %0 {strides = array<i32>} : memref<32x48xf32, #tpu.memory_space<vmem>>, vector<2x48xf32>,
    %cst_1 = arith.constant 0.000000e+00 : f32
    %2 = vector.broadcast %cst_1 : f32 to vector<2x48xf32>
    %c30 = arith.constant 30 : index
    %c0_2 = arith.constant 0 : index
    %3 = vector.load %arg8[%c30, %c0_2] : memref<32x48xf32, #tpu.memory_space<vmem>>, vector<2x48xf32>
    tpu.vector_store %arg8[%c30, %c0_2], %2 {strides = array<i32>} : memref<32x48xf32, #tpu.memory_space<vmem>>, vector<2x48xf32>,
    %c2 = arith.constant 2 : index
    %c0_3 = arith.constant 0 : index
    %4 = vector.load %arg2[%c2, %c0_3] : memref<32x1xf32, #tpu.memory_space<vmem>>, vector<28x1xf32>
    %cst_4 = arith.constant 0.000000e+00 : f32
    %5 = vector.broadcast %cst_4 : f32 to vector<28x48xf32>
    %c0_5 = arith.constant 0 : index
    %c0_6 = arith.constant 0 : index
    %6 = vector.load %arg1[%c0_5, %c0_6] : memref<32x32xf32, #tpu.memory_space<vmem>>, vector<28x32xf32>
    %c0_7 = arith.constant 0 : index
    %c0_8 = arith.constant 0 : index
    %7 = vector.load %arg6[%c0_7, %c0_8] : memref<416x48xf32, #tpu.memory_space<vmem>>, vector<32x48xf32>
    %cst_9 = arith.constant dense<0.000000e+00> : vector<28x48xf32>
    %8 = tpu.matmul %6, %7, %cst_9 {dimension_numbers = #tpu.dot_dimension_numbers<[1], [0], [0], [1], [0, 0, 1, 1], [], []>} : vector<28x32xf32>, vector<32x48xf32>, vector<28x48xf32> -> vector<28x48xf32>
    %9 = arith.addf %5, %8 : vector<28x48xf32>
    %c1 = arith.constant 1 : index
    %c0_10 = arith.constant 0 : index
    %10 = vector.load %arg1[%c1, %c0_10] : memref<32x32xf32, #tpu.memory_space<vmem>>, vector<28x32xf32>
    %c32 = arith.constant 32 : index
    %c0_11 = arith.constant 0 : index
    %11 = vector.load %arg6[%c32, %c0_11] : memref<416x48xf32, #tpu.memory_space<vmem>>, vector<32x48xf32>
    %cst_12 = arith.constant dense<0.000000e+00> : vector<28x48xf32>
    %12 = tpu.matmul %10, %11, %cst_12 {dimension_numbers = #tpu.dot_dimension_numbers<[1], [0], [0], [1], [0, 0, 1, 1], [], []>} : vector<28x32xf32>, vector<32x48xf32>, vector<28x48xf32> -> vector<28x48xf32>
    %13 = arith.addf %9, %12 : vector<28x48xf32>
    %c2_13 = arith.constant 2 : index
    %c0_14 = arith.constant 0 : index
    %14 = vector.load %arg1[%c2_13, %c0_14] : memref<32x32xf32, #tpu.memory_space<vmem>>, vector<28x32xf32>
    %c64 = arith.constant 64 : index
    %c0_15 = arith.constant 0 : index
    %15 = vector.load %arg6[%c64, %c0_15] : memref<416x48xf32, #tpu.memory_space<vmem>>, vector<32x48xf32>
    %cst_16 = arith.constant dense<0.000000e+00> : vector<28x48xf32>
    %16 = tpu.matmul %14, %15, %cst_16 {dimension_numbers = #tpu.dot_dimension_numbers<[1], [0], [0], [1], [0, 0, 1, 1], [], []>} : vector<28x32xf32>, vector<32x48xf32>, vector<28x48xf32> -> vector<28x48xf32>
    %17 = arith.addf %13, %16 : vector<28x48xf32>
    %c3 = arith.constant 3 : index
    %c0_17 = arith.constant 0 : index
    %18 = vector.load %arg1[%c3, %c0_17] : memref<32x32xf32, #tpu.memory_space<vmem>>, vector<28x32xf32>
    %c96 = arith.constant 96 : index
    %c0_18 = arith.constant 0 : index
    %19 = vector.load %arg6[%c96, %c0_18] : memref<416x48xf32, #tpu.memory_space<vmem>>, vector<32x48xf32>
    %cst_19 = arith.constant dense<0.000000e+00> : vector<28x48xf32>
    %20 = tpu.matmul %18, %19, %cst_19 {dimension_numbers = #tpu.dot_dimension_numbers<[1], [0], [0], [1], [0, 0, 1, 1], [], []>} : vector<28x32xf32>, vector<32x48xf32>, vector<28x48xf32> -> vector<28x48xf32>
    %21 = arith.addf %17, %20 : vector<28x48xf32>
    %c4 = arith.constant 4 : index
    %c0_20 = arith.constant 0 : index
    %22 = vector.load %arg1[%c4, %c0_20] : memref<32x32xf32, #tpu.memory_space<vmem>>, vector<28x32xf32>
    %c128 = arith.constant 128 : index
    %c0_21 = arith.constant 0 : index
    %23 = vector.load %arg6[%c128, %c0_21] : memref<416x48xf32, #tpu.memory_space<vmem>>, vector<32x48xf32>
    %cst_22 = arith.constant dense<0.000000e+00> : vector<28x48xf32>
    %24 = tpu.matmul %22, %23, %cst_22 {dimension_numbers = #tpu.dot_dimension_numbers<[1], [0], [0], [1], [0, 0, 1, 1], [], []>} : vector<28x32xf32>, vector<32x48xf32>, vector<28x48xf32> -> vector<28x48xf32>
    %25 = arith.addf %21, %24 : vector<28x48xf32>
    %c160 = arith.constant 160 : index
    %c0_23 = arith.constant 0 : index
    %26 = vector.load %arg6[%c160, %c0_23] : memref<416x48xf32, #tpu.memory_space<vmem>>, vector<1x48xf32>
    %27 = vector.broadcast %26 : vector<1x48xf32> to vector<28x48xf32>
    %28 = arith.addf %25, %27 : vector<28x48xf32>
    %cst_24 = arith.constant 0.000000e+00 : f32
    %29 = vector.broadcast %cst_24 : f32 to vector<28x48xf32>
    %30 = arith.maximumf %28, %29 : vector<28x48xf32>
    %31 = vector.shape_cast %4 : vector<28x1xf32> to vector<28x1xf32>
    %32 = vector.broadcast %31 : vector<28x1xf32> to vector<28x48xf32>
    %33 = arith.mulf %30, %32 : vector<28x48xf32>
    %c2_25 = arith.constant 2 : index
    %c0_26 = arith.constant 0 : index
    %34 = vector.load %arg8[%c2_25, %c0_26] : memref<32x48xf32, #tpu.memory_space<vmem>>, vector<28x48xf32>
    tpu.vector_store %arg8[%c2_25, %c0_26], %33 {strides = array<i32>} : memref<32x48xf32, #tpu.memory_space<vmem>>, vector<28x48xf32>,
    %cst_27 = arith.constant 0.000000e+00 : f32
    %35 = vector.broadcast %cst_27 : f32 to vector<28x48xf32>
    %c0_28 = arith.constant 0 : index
    %c0_29 = arith.constant 0 : index
    %36 = vector.load %arg8[%c0_28, %c0_29] : memref<32x48xf32, #tpu.memory_space<vmem>>, vector<28x48xf32>
    %c168 = arith.constant 168 : index
    %c0_30 = arith.constant 0 : index
    %37 = vector.load %arg6[%c168, %c0_30] : memref<416x48xf32, #tpu.memory_space<vmem>>, vector<48x48xf32>
    %cst_31 = arith.constant dense<0.000000e+00> : vector<28x48xf32>
    %38 = tpu.matmul %36, %37, %cst_31 {dimension_numbers = #tpu.dot_dimension_numbers<[1], [0], [0], [1], [0, 0, 1, 1], [], []>} : vector<28x48xf32>, vector<48x48xf32>, vector<28x48xf32> -> vector<28x48xf32>
    %39 = arith.addf %35, %38 : vector<28x48xf32>
    %c1_32 = arith.constant 1 : index
    %c0_33 = arith.constant 0 : index
    %40 = vector.load %arg8[%c1_32, %c0_33] : memref<32x48xf32, #tpu.memory_space<vmem>>, vector<28x48xf32>
    %c216 = arith.constant 216 : index
    %c0_34 = arith.constant 0 : index
    %41 = vector.load %arg6[%c216, %c0_34] : memref<416x48xf32, #tpu.memory_space<vmem>>, vector<48x48xf32>
    %cst_35 = arith.constant dense<0.000000e+00> : vector<28x48xf32>
    %42 = tpu.matmul %40, %41, %cst_35 {dimension_numbers = #tpu.dot_dimension_numbers<[1], [0], [0], [1], [0, 0, 1, 1], [], []>} : vector<28x48xf32>, vector<48x48xf32>, vector<28x48xf32> -> vector<28x48xf32>
    %43 = arith.addf %39, %42 : vector<28x48xf32>
    %c2_36 = arith.constant 2 : index
    %c0_37 = arith.constant 0 : index
    %44 = vector.load %arg8[%c2_36, %c0_37] : memref<32x48xf32, #tpu.memory_space<vmem>>, vector<28x48xf32>
    %c264 = arith.constant 264 : index
    %c0_38 = arith.constant 0 : index
    %45 = vector.load %arg6[%c264, %c0_38] : memref<416x48xf32, #tpu.memory_space<vmem>>, vector<48x48xf32>
    %cst_39 = arith.constant dense<0.000000e+00> : vector<28x48xf32>
    %46 = tpu.matmul %44, %45, %cst_39 {dimension_numbers = #tpu.dot_dimension_numbers<[1], [0], [0], [1], [0, 0, 1, 1], [], []>} : vector<28x48xf32>, vector<48x48xf32>, vector<28x48xf32> -> vector<28x48xf32>
    %47 = arith.addf %43, %46 : vector<28x48xf32>
    %c3_40 = arith.constant 3 : index
    %c0_41 = arith.constant 0 : index
    %48 = vector.load %arg8[%c3_40, %c0_41] : memref<32x48xf32, #tpu.memory_space<vmem>>, vector<28x48xf32>
    %c312 = arith.constant 312 : index
    %c0_42 = arith.constant 0 : index
    %49 = vector.load %arg6[%c312, %c0_42] : memref<416x48xf32, #tpu.memory_space<vmem>>, vector<48x48xf32>
    %cst_43 = arith.constant dense<0.000000e+00> : vector<28x48xf32>
    %50 = tpu.matmul %48, %49, %cst_43 {dimension_numbers = #tpu.dot_dimension_numbers<[1], [0], [0], [1], [0, 0, 1, 1], [], []>} : vector<28x48xf32>, vector<48x48xf32>, vector<28x48xf32> -> vector<28x48xf32>
    %51 = arith.addf %47, %50 : vector<28x48xf32>
    %c4_44 = arith.constant 4 : index
    %c0_45 = arith.constant 0 : index
    %52 = vector.load %arg8[%c4_44, %c0_45] : memref<32x48xf32, #tpu.memory_space<vmem>>, vector<28x48xf32>
    %c360 = arith.constant 360 : index
    %c0_46 = arith.constant 0 : index
    %53 = vector.load %arg6[%c360, %c0_46] : memref<416x48xf32, #tpu.memory_space<vmem>>, vector<48x48xf32>
    %cst_47 = arith.constant dense<0.000000e+00> : vector<28x48xf32>
    %54 = tpu.matmul %52, %53, %cst_47 {dimension_numbers = #tpu.dot_dimension_numbers<[1], [0], [0], [1], [0, 0, 1, 1], [], []>} : vector<28x48xf32>, vector<48x48xf32>, vector<28x48xf32> -> vector<28x48xf32>
    %55 = arith.addf %51, %54 : vector<28x48xf32>
    %c408 = arith.constant 408 : index
    %c0_48 = arith.constant 0 : index
    %56 = vector.load %arg6[%c408, %c0_48] : memref<416x48xf32, #tpu.memory_space<vmem>>, vector<1x48xf32>
    %57 = vector.broadcast %56 : vector<1x48xf32> to vector<28x48xf32>
    %58 = arith.addf %55, %57 : vector<28x48xf32>
    %cst_49 = arith.constant 0.000000e+00 : f32
    %59 = vector.broadcast %cst_49 : f32 to vector<28x48xf32>
    %60 = arith.maximumf %58, %59 : vector<28x48xf32>
    %61 = arith.mulf %60, %32 : vector<28x48xf32>
    %c2_50 = arith.constant 2 : index
    %c0_51 = arith.constant 0 : index
    %62 = vector.load %arg1[%c2_50, %c0_51] : memref<32x32xf32, #tpu.memory_space<vmem>>, vector<28x32xf32>
    %c0_52 = arith.constant 0 : index
    %c0_53 = arith.constant 0 : index
    %63 = vector.load %arg5[%c0_52, %c0_53] : memref<120x32xf32, #tpu.memory_space<vmem>>, vector<32x32xf32>
    %cst_54 = arith.constant dense<0.000000e+00> : vector<28x32xf32>
    %64 = tpu.matmul %62, %63, %cst_54 {dimension_numbers = #tpu.dot_dimension_numbers<[1], [0], [0], [1], [0, 0, 1, 1], [], []>} : vector<28x32xf32>, vector<32x32xf32>, vector<28x32xf32> -> vector<28x32xf32>
    %c32_55 = arith.constant 32 : index
    %c0_56 = arith.constant 0 : index
    %65 = vector.load %arg5[%c32_55, %c0_56] : memref<120x32xf32, #tpu.memory_space<vmem>>, vector<48x32xf32>
    %cst_57 = arith.constant dense<0.000000e+00> : vector<28x32xf32>
    %66 = tpu.matmul %61, %65, %cst_57 {dimension_numbers = #tpu.dot_dimension_numbers<[1], [0], [0], [1], [0, 0, 1, 1], [], []>} : vector<28x48xf32>, vector<48x32xf32>, vector<28x32xf32> -> vector<28x32xf32>
    %67 = arith.addf %64, %66 : vector<28x32xf32>
    %c80 = arith.constant 80 : index
    %c0_58 = arith.constant 0 : index
    %68 = vector.load %arg5[%c80, %c0_58] : memref<120x32xf32, #tpu.memory_space<vmem>>, vector<1x32xf32>
    %69 = vector.broadcast %68 : vector<1x32xf32> to vector<28x32xf32>
    %70 = arith.addf %67, %69 : vector<28x32xf32>
    %cst_59 = arith.constant 0.000000e+00 : f32
    %71 = vector.broadcast %cst_59 : f32 to vector<28x32xf32>
    %72 = arith.maximumf %70, %71 : vector<28x32xf32>
    %73 = vector.shape_cast %4 : vector<28x1xf32> to vector<28x1xf32>
    %74 = vector.broadcast %73 : vector<28x1xf32> to vector<28x32xf32>
    %75 = arith.mulf %72, %74 : vector<28x32xf32>
    %c88 = arith.constant 88 : index
    %c0_60 = arith.constant 0 : index
    %76 = vector.load %arg5[%c88, %c0_60] : memref<120x32xf32, #tpu.memory_space<vmem>>, vector<1x32xf32>
    %c96_61 = arith.constant 96 : index
    %c0_62 = arith.constant 0 : index
    %77 = vector.load %arg5[%c96_61, %c0_62] : memref<120x32xf32, #tpu.memory_space<vmem>>, vector<1x32xf32>
    %cst_63 = arith.constant dense<0.000000e+00> : vector<28xf32>
    %78 = vector.multi_reduction <add>, %75, %cst_63 [1] : vector<28x32xf32> to vector<28xf32>
    %79 = vector.shape_cast %78 : vector<28xf32> to vector<28x1xf32>
    %cst_64 = arith.constant 3.200000e+01 : f32
    %80 = vector.broadcast %cst_64 : f32 to vector<28x1xf32>
    %81 = arith.divf %79, %80 : vector<28x1xf32>
    %82 = vector.broadcast %81 : vector<28x1xf32> to vector<28x32xf32>
    %83 = arith.subf %75, %82 : vector<28x32xf32>
    %84 = arith.mulf %83, %83 : vector<28x32xf32>
    %cst_65 = arith.constant dense<0.000000e+00> : vector<28xf32>
    %85 = vector.multi_reduction <add>, %84, %cst_65 [1] : vector<28x32xf32> to vector<28xf32>
    %86 = vector.shape_cast %85 : vector<28xf32> to vector<28x1xf32>
    %cst_66 = arith.constant 3.200000e+01 : f32
    %87 = vector.broadcast %cst_66 : f32 to vector<28x1xf32>
    %88 = arith.divf %86, %87 : vector<28x1xf32>
    %89 = vector.broadcast %81 : vector<28x1xf32> to vector<28x32xf32>
    %90 = arith.subf %75, %89 : vector<28x32xf32>
    %cst_67 = arith.constant 9.99999974E-6 : f32
    %91 = vector.broadcast %cst_67 : f32 to vector<28x1xf32>
    %92 = arith.addf %88, %91 : vector<28x1xf32>
    %93 = math.rsqrt %92 : vector<28x1xf32>
    %94 = vector.broadcast %93 : vector<28x1xf32> to vector<28x32xf32>
    %95 = arith.mulf %90, %94 : vector<28x32xf32>
    %96 = vector.broadcast %76 : vector<1x32xf32> to vector<28x32xf32>
    %97 = arith.mulf %95, %96 : vector<28x32xf32>
    %98 = vector.broadcast %77 : vector<1x32xf32> to vector<28x32xf32>
    %99 = arith.addf %97, %98 : vector<28x32xf32>
    %cst_68 = arith.constant 0.000000e+00 : f32
    %100 = vector.broadcast %cst_68 : f32 to vector<27x16xf32>
    %101 = vector.extract_strided_slice %99 {offsets = [0, 0], sizes = [27, 32], strides = [1, 1]} : vector<28x32xf32> to vector<27x32xf32>
    %c0_69 = arith.constant 0 : index
    %c0_70 = arith.constant 0 : index
    %102 = vector.load %arg4[%c0_69, %c0_70] : memref<176x16xf32, #tpu.memory_space<vmem>>, vector<32x16xf32>
    %cst_71 = arith.constant dense<0.000000e+00> : vector<27x16xf32>
    %103 = tpu.matmul %101, %102, %cst_71 {dimension_numbers = #tpu.dot_dimension_numbers<[1], [0], [0], [1], [0, 0, 1, 1], [], []>} : vector<27x32xf32>, vector<32x16xf32>, vector<27x16xf32> -> vector<27x16xf32>
    %104 = arith.addf %100, %103 : vector<27x16xf32>
    %105 = vector.extract_strided_slice %99 {offsets = [1, 0], sizes = [27, 32], strides = [1, 1]} : vector<28x32xf32> to vector<27x32xf32>
    %c32_72 = arith.constant 32 : index
    %c0_73 = arith.constant 0 : index
    %106 = vector.load %arg4[%c32_72, %c0_73] : memref<176x16xf32, #tpu.memory_space<vmem>>, vector<32x16xf32>
    %cst_74 = arith.constant dense<0.000000e+00> : vector<27x16xf32>
    %107 = tpu.matmul %105, %106, %cst_74 {dimension_numbers = #tpu.dot_dimension_numbers<[1], [0], [0], [1], [0, 0, 1, 1], [], []>} : vector<27x32xf32>, vector<32x16xf32>, vector<27x16xf32> -> vector<27x16xf32>
    %108 = arith.addf %104, %107 : vector<27x16xf32>
    %c64_75 = arith.constant 64 : index
    %c0_76 = arith.constant 0 : index
    %109 = vector.load %arg4[%c64_75, %c0_76] : memref<176x16xf32, #tpu.memory_space<vmem>>, vector<1x16xf32>
    %110 = vector.broadcast %109 : vector<1x16xf32> to vector<27x16xf32>
    %111 = arith.addf %108, %110 : vector<27x16xf32>
    %cst_77 = arith.constant 0.000000e+00 : f32
    %112 = vector.broadcast %cst_77 : f32 to vector<27x16xf32>
    %113 = arith.maximumf %111, %112 : vector<27x16xf32>
    %114 = vector.extract_strided_slice %113 {offsets = [0, 0], sizes = [7, 16], strides = [1, 1]} : vector<27x16xf32> to vector<7x16xf32>
    %cst_78 = arith.constant dense<0xFF800000> : vector<16xf32>
    %115 = vector.multi_reduction <maximumf>, %114, %cst_78 [0] : vector<7x16xf32> to vector<16xf32>
    %116 = vector.shape_cast %115 : vector<16xf32> to vector<1x16xf32>
    %117 = vector.extract_strided_slice %113 {offsets = [16, 0], sizes = [7, 16], strides = [1, 1]} : vector<27x16xf32> to vector<7x16xf32>
    %cst_79 = arith.constant dense<0xFF800000> : vector<16xf32>
    %118 = vector.multi_reduction <maximumf>, %117, %cst_79 [0] : vector<7x16xf32> to vector<16xf32>
    %119 = vector.shape_cast %118 : vector<16xf32> to vector<1x16xf32>
    %120 = tpu.concatenate %116, %119 in 0 : vector<1x16xf32>, vector<1x16xf32> -> vector<2x16xf32>
    %cst_80 = arith.constant 0.000000e+00 : f32
    %121 = vector.broadcast %cst_80 : f32 to vector<26x16xf32>
    %122 = vector.extract_strided_slice %99 {offsets = [0, 0], sizes = [26, 32], strides = [1, 1]} : vector<28x32xf32> to vector<26x32xf32>
    %c72 = arith.constant 72 : index
    %c0_81 = arith.constant 0 : index
    %123 = vector.load %arg4[%c72, %c0_81] : memref<176x16xf32, #tpu.memory_space<vmem>>, vector<32x16xf32>
    %cst_82 = arith.constant dense<0.000000e+00> : vector<26x16xf32>
    %124 = tpu.matmul %122, %123, %cst_82 {dimension_numbers = #tpu.dot_dimension_numbers<[1], [0], [0], [1], [0, 0, 1, 1], [], []>} : vector<26x32xf32>, vector<32x16xf32>, vector<26x16xf32> -> vector<26x16xf32>
    %125 = arith.addf %121, %124 : vector<26x16xf32>
    %126 = vector.extract_strided_slice %99 {offsets = [1, 0], sizes = [26, 32], strides = [1, 1]} : vector<28x32xf32> to vector<26x32xf32>
    %c104 = arith.constant 104 : index
    %c0_83 = arith.constant 0 : index
    %127 = vector.load %arg4[%c104, %c0_83] : memref<176x16xf32, #tpu.memory_space<vmem>>, vector<32x16xf32>
    %cst_84 = arith.constant dense<0.000000e+00> : vector<26x16xf32>
    %128 = tpu.matmul %126, %127, %cst_84 {dimension_numbers = #tpu.dot_dimension_numbers<[1], [0], [0], [1], [0, 0, 1, 1], [], []>} : vector<26x32xf32>, vector<32x16xf32>, vector<26x16xf32> -> vector<26x16xf32>
    %129 = arith.addf %125, %128 : vector<26x16xf32>
    %130 = vector.extract_strided_slice %99 {offsets = [2, 0], sizes = [26, 32], strides = [1, 1]} : vector<28x32xf32> to vector<26x32xf32>
    %c136 = arith.constant 136 : index
    %c0_85 = arith.constant 0 : index
    %131 = vector.load %arg4[%c136, %c0_85] : memref<176x16xf32, #tpu.memory_space<vmem>>, vector<32x16xf32>
    %cst_86 = arith.constant dense<0.000000e+00> : vector<26x16xf32>
    %132 = tpu.matmul %130, %131, %cst_86 {dimension_numbers = #tpu.dot_dimension_numbers<[1], [0], [0], [1], [0, 0, 1, 1], [], []>} : vector<26x32xf32>, vector<32x16xf32>, vector<26x16xf32> -> vector<26x16xf32>
    %133 = arith.addf %129, %132 : vector<26x16xf32>
    %c168_87 = arith.constant 168 : index
    %c0_88 = arith.constant 0 : index
    %134 = vector.load %arg4[%c168_87, %c0_88] : memref<176x16xf32, #tpu.memory_space<vmem>>, vector<1x16xf32>
    %135 = vector.broadcast %134 : vector<1x16xf32> to vector<26x16xf32>
    %136 = arith.addf %133, %135 : vector<26x16xf32>
    %cst_89 = arith.constant 0.000000e+00 : f32
    %137 = vector.broadcast %cst_89 : f32 to vector<26x16xf32>
    %138 = arith.maximumf %136, %137 : vector<26x16xf32>
    %139 = vector.extract_strided_slice %138 {offsets = [0, 0], sizes = [6, 16], strides = [1, 1]} : vector<26x16xf32> to vector<6x16xf32>
    %cst_90 = arith.constant dense<0xFF800000> : vector<16xf32>
    %140 = vector.multi_reduction <maximumf>, %139, %cst_90 [0] : vector<6x16xf32> to vector<16xf32>
    %141 = vector.shape_cast %140 : vector<16xf32> to vector<1x16xf32>
    %142 = vector.extract_strided_slice %138 {offsets = [16, 0], sizes = [6, 16], strides = [1, 1]} : vector<26x16xf32> to vector<6x16xf32>
    %cst_91 = arith.constant dense<0xFF800000> : vector<16xf32>
    %143 = vector.multi_reduction <maximumf>, %142, %cst_91 [0] : vector<6x16xf32> to vector<16xf32>
    %144 = vector.shape_cast %143 : vector<16xf32> to vector<1x16xf32>
    %145 = tpu.concatenate %141, %144 in 0 : vector<1x16xf32>, vector<1x16xf32> -> vector<2x16xf32>
    %146 = tpu.concatenate %120, %145 in 1 : vector<2x16xf32>, vector<2x16xf32> -> vector<2x32xf32>
    %c104_92 = arith.constant 104 : index
    %c0_93 = arith.constant 0 : index
    %147 = vector.load %arg5[%c104_92, %c0_93] : memref<120x32xf32, #tpu.memory_space<vmem>>, vector<1x32xf32>
    %c112 = arith.constant 112 : index
    %c0_94 = arith.constant 0 : index
    %148 = vector.load %arg5[%c112, %c0_94] : memref<120x32xf32, #tpu.memory_space<vmem>>, vector<1x32xf32>
    %cst_95 = arith.constant dense<0.000000e+00> : vector<2xf32>
    %149 = vector.multi_reduction <add>, %146, %cst_95 [1] : vector<2x32xf32> to vector<2xf32>
    %150 = vector.shape_cast %149 : vector<2xf32> to vector<2x1xf32>
    %cst_96 = arith.constant 3.200000e+01 : f32
    %151 = vector.broadcast %cst_96 : f32 to vector<2x1xf32>
    %152 = arith.divf %150, %151 : vector<2x1xf32>
    %153 = vector.broadcast %152 : vector<2x1xf32> to vector<2x32xf32>
    %154 = arith.subf %146, %153 : vector<2x32xf32>
    %155 = arith.mulf %154, %154 : vector<2x32xf32>
    %cst_97 = arith.constant dense<0.000000e+00> : vector<2xf32>
    %156 = vector.multi_reduction <add>, %155, %cst_97 [1] : vector<2x32xf32> to vector<2xf32>
    %157 = vector.shape_cast %156 : vector<2xf32> to vector<2x1xf32>
    %cst_98 = arith.constant 3.200000e+01 : f32
    %158 = vector.broadcast %cst_98 : f32 to vector<2x1xf32>
    %159 = arith.divf %157, %158 : vector<2x1xf32>
    %160 = vector.broadcast %152 : vector<2x1xf32> to vector<2x32xf32>
    %161 = arith.subf %146, %160 : vector<2x32xf32>
    %cst_99 = arith.constant 9.99999974E-6 : f32
    %162 = vector.broadcast %cst_99 : f32 to vector<2x1xf32>
    %163 = arith.addf %159, %162 : vector<2x1xf32>
    %164 = math.rsqrt %163 : vector<2x1xf32>
    %165 = vector.broadcast %164 : vector<2x1xf32> to vector<2x32xf32>
    %166 = arith.mulf %161, %165 : vector<2x32xf32>
    %167 = vector.broadcast %147 : vector<1x32xf32> to vector<2x32xf32>
    %168 = arith.mulf %166, %167 : vector<2x32xf32>
    %169 = vector.broadcast %148 : vector<1x32xf32> to vector<2x32xf32>
    %170 = arith.addf %168, %169 : vector<2x32xf32>
    %c0_100 = arith.constant 0 : index
    %c0_101 = arith.constant 0 : index
    %171 = vector.load %arg3[%c0_100, %c0_101] : memref<40x4xf32, #tpu.memory_space<vmem>>, vector<32x4xf32>
    %cst_102 = arith.constant dense<0.000000e+00> : vector<2x4xf32>
    %172 = tpu.matmul %170, %171, %cst_102 {dimension_numbers = #tpu.dot_dimension_numbers<[1], [0], [0], [1], [0, 0, 1, 1], [], []>} : vector<2x32xf32>, vector<32x4xf32>, vector<2x4xf32> -> vector<2x4xf32>
    %c32_103 = arith.constant 32 : index
    %c0_104 = arith.constant 0 : index
    %173 = vector.load %arg3[%c32_103, %c0_104] : memref<40x4xf32, #tpu.memory_space<vmem>>, vector<1x4xf32>
    %174 = vector.broadcast %173 : vector<1x4xf32> to vector<2x4xf32>
    %175 = arith.addf %172, %174 : vector<2x4xf32>
    %c0_105 = arith.constant 0 : index
    %c0_106 = arith.constant 0 : index
    %176 = vector.load %arg7[%c0_105, %c0_106] : memref<2x4xf32, #tpu.memory_space<vmem>>, vector<2x4xf32>
    tpu.vector_store %arg7[%c0_105, %c0_106], %175 {strides = array<i32>} : memref<2x4xf32, #tpu.memory_space<vmem>>, vector<2x4xf32>,
    return
  }
  func.func @transform_0(%arg0: i32) -> (i32, i32) {
    %c0_i32 = arith.constant 0 : i32
    %c0_i32_0 = arith.constant 0 : i32
    return %arg0, %c0_i32 : i32, i32
  }
  func.func @transform_1(%arg0: i32) -> (i32, i32) {
    %c0_i32 = arith.constant 0 : i32
    %c0_i32_0 = arith.constant 0 : i32
    return %arg0, %c0_i32 : i32, i32
  }
  func.func @transform_2(%arg0: i32) -> (i32, i32) {
    %c0_i32 = arith.constant 0 : i32
    %c0_i32_0 = arith.constant 0 : i32
    %c0_i32_1 = arith.constant 0 : i32
    return %c0_i32, %c0_i32_0 : i32, i32
  }
  func.func @transform_3(%arg0: i32) -> (i32, i32) {
    %c0_i32 = arith.constant 0 : i32
    %c0_i32_0 = arith.constant 0 : i32
    %c0_i32_1 = arith.constant 0 : i32
    return %c0_i32, %c0_i32_0 : i32, i32
  }
  func.func @transform_4(%arg0: i32) -> (i32, i32) {
    %c0_i32 = arith.constant 0 : i32
    %c0_i32_0 = arith.constant 0 : i32
    %c0_i32_1 = arith.constant 0 : i32
    return %c0_i32, %c0_i32_0 : i32, i32
  }
  func.func @transform_5(%arg0: i32) -> (i32, i32) {
    %c0_i32 = arith.constant 0 : i32
    %c0_i32_0 = arith.constant 0 : i32
    %c0_i32_1 = arith.constant 0 : i32
    return %c0_i32, %c0_i32_0 : i32, i32
  }
  func.func @transform_6(%arg0: i32) -> (i32, i32) {
    %c0_i32 = arith.constant 0 : i32
    %c0_i32_0 = arith.constant 0 : i32
    return %arg0, %c0_i32 : i32, i32
  }
}

</mosaic_0001>

<llo_original>
// kernel: _lambda_.1
$region0: #{_lambda_.1}
  #allocation0 [shape = 'u32[]', space=smem, size = 0x4, offset = 0x4, fixed_abs, tag = 'smem constant byte address 0x4 - core index']
  #allocation1 [shape = 'u32[72,128]{1,0:T(1,128)}', space=vmem, size = 0x9000, scoped, tag = 'internal scratch']
  #allocation2 [shape = 'f32[32,48]{1,0:T(8,128)}', space=vmem, size = 0x4000, scoped, tag = 'scratch operand']
  %s0 = inlined_call_operand.vmem [shape: f32[32,32], index: 0, kind: input, shape index: {}]
  %s1 = inlined_call_operand.vmem [shape: f32[32,1], index: 1, kind: input, shape index: {}]
  %s2 = inlined_call_operand.vmem [shape: f32[40,4], index: 2, kind: input, shape index: {}]
  %s3 = inlined_call_operand.vmem [shape: f32[176,16], index: 3, kind: input, shape index: {}]
  %s4 = inlined_call_operand.vmem [shape: f32[120,32], index: 4, kind: input, shape index: {}]
  %s5 = inlined_call_operand.vmem [shape: f32[416,48], index: 5, kind: input, shape index: {}]
  %s6 = inlined_call_operand.hbm [shape: f32[2,4], index: 6, kind: output, shape index: {}]
  %s7 = sld [smem:[#allocation0]]
  $region34: #{_lambda_.1} parent=0
    _
  %s9 = ssub.s32 1, %s7
  %s10 = scalar_select 0, %s9, %s7
  $region1: #{_lambda_.1} parent=0
    #allocation3 [shape = 'u8[1024]{0}', space=vmem, size = 0x400, scoped, tag = 'output window, operand 0, single buffered']
    #allocation4 [shape = 's32[1]{0}', space=sflag, size = 0x4, scoped, tag = 'scoped memory for _lambda_.1']
    %11 = vsyncpa [#allocation4], 0
    // Predicated region
    $region2: #{_lambda_.1} parent=1 // pred_check
      _
    $region3: #{_lambda_.1} parent=1 // pred_check_branch
      %13 = sbr.rel (0) target = $region5
    $region4: #{_lambda_.1} parent=1 // pred_region
      _
    $region5: #{_lambda_.1} parent=1 // pred_fallthru
      _
    // Predicated region
    $region6: #{_lambda_.1} parent=1 // pred_check
      _
    $region7: #{_lambda_.1} parent=1 // pred_check_branch
      %15 = sbr.rel (0) target = $region9
    $region8: #{_lambda_.1} parent=1 // pred_region
      _
    $region9: #{_lambda_.1} parent=1 // pred_fallthru
      _
    // Predicated region
    $region10: #{_lambda_.1} parent=1 // pred_check
      _
    $region11: #{_lambda_.1} parent=1 // pred_check_branch
      %17 = sbr.rel (0) target = $region13
    $region12: #{_lambda_.1} parent=1 // pred_region
      _
    $region13: #{_lambda_.1} parent=1 // pred_fallthru
      _
    // Predicated region
    $region14: #{_lambda_.1} parent=1 // pred_check
      _
    $region15: #{_lambda_.1} parent=1 // pred_check_branch
      %19 = sbr.rel (0) target = $region17
    $region16: #{_lambda_.1} parent=1 // pred_region
      _
    $region17: #{_lambda_.1} parent=1 // pred_fallthru
      _
    // Predicated region
    $region18: #{_lambda_.1} parent=1 // pred_check
      _
    $region19: #{_lambda_.1} parent=1 // pred_check_branch
      %21 = sbr.rel (0) target = $region21
    $region20: #{_lambda_.1} parent=1 // pred_region
      _
    $region21: #{_lambda_.1} parent=1 // pred_fallthru
      _
    // Predicated region
    $region22: #{_lambda_.1} parent=1 // pred_check
      _
    $region23: #{_lambda_.1} parent=1 // pred_check_branch
      %23 = sbr.rel (0) target = $region25
    $region24: #{_lambda_.1} parent=1 // pred_region
      _
    $region25: #{_lambda_.1} parent=1 // pred_fallthru
      _
    %vm24 = vcmask 386048
    %25 = vst.msk [vmem:[#allocation2] sm:$0x3] %vm24, 0.0
    %26 = vst.msk [vmem:[#allocation2 + $0x1e] sm:$0x3] %vm24, 0.0
    %v27 = vld [vmem:[%s1 + $0x2] sm:$0xff]
    %v28 = vld [vmem:[%s1 + $0xa] sm:$0xff]
    %v29 = vld [vmem:[%s1 + $0x12] sm:$0xff]
    %v30 = vld [vmem:[%s1 + $0x1a] sm:$0xf]
    %v31 = vld [vmem:[%s0] sm:$0xff]
    %v32 = vld [vmem:[%s0 + $0x8] sm:$0xff]
    %v33 = vld [vmem:[%s0 + $0x10] sm:$0xff]
    %v34 = vld [vmem:[%s0 + $0x18] sm:$0xf]
    %v35 = vld [vmem:[%s5] sm:$0xff]
    %v36 = vld [vmem:[%s5 + $0x8] sm:$0xff]
    %v37 = vld [vmem:[%s5 + $0x10] sm:$0xff]
    %v38 = vld [vmem:[%s5 + $0x18] sm:$0xff]
    %v39 = vld [vmem:[%s0 + $0x1] sm:$0xff]
    %v40 = vld [vmem:[%s0 + $0x9] sm:$0xff]
    %v41 = vld [vmem:[%s0 + $0x11] sm:$0xff]
    %v42 = vld [vmem:[%s0 + $0x19] sm:$0xf]
    %v43 = vld [vmem:[%s5 + $0x20] sm:$0xff]
    %v44 = vld [vmem:[%s5 + $0x28] sm:$0xff]
    %v45 = vld [vmem:[%s5 + $0x30] sm:$0xff]
    %v46 = vld [vmem:[%s5 + $0x38] sm:$0xff]
    %vm47 = vcmask 261120
    %v49 = vsel %vm47, %v39, 0
    %v52 = vsel %vm47, %v40, 0
    %v55 = vsel %vm47, %v41, 0
    %v58 = vsel %vm47, %v42, 0
    %60 = vmatpush.msra.mxu0 0.0
    %61 = vmatpush.msra.mxu0 0.0
    %62 = vmatpush.msra.mxu0 0.0
    %63 = vmatpush.msra.mxu0 0.0
    %64 = vmatpush.msra.mxu0 0.0
    %65 = vmatpush.msra.mxu0 0.0
    %66 = vmatpush.msra.mxu0 0.0
    %67 = vmatpush.msra.mxu0 0.0
    %68 = vmatpush.msra.mxu0 0.0
    %69 = vmatpush.msra.mxu0 0.0
    %70 = vmatpush.msra.mxu0 0.0
    %71 = vmatpush.msra.mxu0 0.0
    %72 = vmatpush.msra.mxu0 %v46
    %73 = vmatpush.msra.mxu0 %v45
    %74 = vmatpush.msra.mxu0 %v44
    %75 = vmatpush.msra.mxu0 %v43
    %76 = vmatmul.f32.gmra.mxu0 %v49
    %v77 = vpop.f32.mrf.mxu0
    %v78 = vadd.f32 0.0, %v77
    %79 = vmatmul.f32.gmra.mxu0 %v52
    %v80 = vpop.f32.mrf.mxu0
    %v81 = vadd.f32 0.0, %v80
    %82 = vmatmul.f32.gmra.mxu0 %v55
    %v83 = vpop.f32.mrf.mxu0
    %v84 = vadd.f32 0.0, %v83
    %85 = vmatmul.f32.gmra.mxu0 %v58
    %v86 = vpop.f32.mrf.mxu0
    %v87 = vadd.f32 0.0, %v86
    %88 = vdwg.mxu0
    %v90 = vsel %vm47, %v31, 0
    %v93 = vsel %vm47, %v32, 0
    %v96 = vsel %vm47, %v33, 0
    %v99 = vsel %vm47, %v34, 0
    %101 = vmatpush.msra.mxu0 0.0
    %102 = vmatpush.msra.mxu0 0.0
    %103 = vmatpush.msra.mxu0 0.0
    %104 = vmatpush.msra.mxu0 0.0
    %105 = vmatpush.msra.mxu0 0.0
    %106 = vmatpush.msra.mxu0 0.0
    %107 = vmatpush.msra.mxu0 0.0
    %108 = vmatpush.msra.mxu0 0.0
    %109 = vmatpush.msra.mxu0 0.0
    %110 = vmatpush.msra.mxu0 0.0
    %111 = vmatpush.msra.mxu0 0.0
    %112 = vmatpush.msra.mxu0 0.0
    %113 = vmatpush.msra.mxu0 %v38
    %114 = vmatpush.msra.mxu0 %v37
    %115 = vmatpush.msra.mxu0 %v36
    %116 = vmatpush.msra.mxu0 %v35
    %117 = vmatmul.f32.gmra.mxu0 %v90
    %v118 = vpop.f32.mrf.mxu0
    %v119 = vadd.f32 %v78, %v118
    %120 = vmatmul.f32.gmra.mxu0 %v93
    %v121 = vpop.f32.mrf.mxu0
    %v122 = vadd.f32 %v81, %v121
    %123 = vmatmul.f32.gmra.mxu0 %v96
    %v124 = vpop.f32.mrf.mxu0
    %v125 = vadd.f32 %v84, %v124
    %126 = vmatmul.f32.gmra.mxu0 %v99
    %v127 = vpop.f32.mrf.mxu0
    %v128 = vadd.f32 %v87, %v127
    %129 = vdwg.mxu0
    %v130 = vld [vmem:[%s0 + $0x2] sm:$0xff]
    %v131 = vld [vmem:[%s0 + $0xa] sm:$0xff]
    %v132 = vld [vmem:[%s0 + $0x12] sm:$0xff]
    %v133 = vld [vmem:[%s0 + $0x1a] sm:$0xf]
    %v134 = vld [vmem:[%s5 + $0x40] sm:$0xff]
    %v135 = vld [vmem:[%s5 + $0x48] sm:$0xff]
    %v136 = vld [vmem:[%s5 + $0x50] sm:$0xff]
    %v137 = vld [vmem:[%s5 + $0x58] sm:$0xff]
    %v139 = vsel %vm47, %v130, 0
    %v142 = vsel %vm47, %v131, 0
    %v145 = vsel %vm47, %v132, 0
    %v148 = vsel %vm47, %v133, 0
    %150 = vmatpush.msra.mxu0 0.0
    %151 = vmatpush.msra.mxu0 0.0
    %152 = vmatpush.msra.mxu0 0.0
    %153 = vmatpush.msra.mxu0 0.0
    %154 = vmatpush.msra.mxu0 0.0
    %155 = vmatpush.msra.mxu0 0.0
    %156 = vmatpush.msra.mxu0 0.0
    %157 = vmatpush.msra.mxu0 0.0
    %158 = vmatpush.msra.mxu0 0.0
    %159 = vmatpush.msra.mxu0 0.0
    %160 = vmatpush.msra.mxu0 0.0
    %161 = vmatpush.msra.mxu0 0.0
    %162 = vmatpush.msra.mxu0 %v137
    %163 = vmatpush.msra.mxu0 %v136
    %164 = vmatpush.msra.mxu0 %v135
    %165 = vmatpush.msra.mxu0 %v134
    %166 = vmatmul.f32.gmra.mxu0 %v139
    %v167 = vpop.f32.mrf.mxu0
    %v168 = vadd.f32 0.0, %v167
    %169 = vmatmul.f32.gmra.mxu0 %v142
    %v170 = vpop.f32.mrf.mxu0
    %v171 = vadd.f32 0.0, %v170
    %172 = vmatmul.f32.gmra.mxu0 %v145
    %v173 = vpop.f32.mrf.mxu0
    %v174 = vadd.f32 0.0, %v173
    %175 = vmatmul.f32.gmra.mxu0 %v148
    %v176 = vpop.f32.mrf.mxu0
    %v177 = vadd.f32 0.0, %v176
    %178 = vdwg.mxu0
    %v179 = vadd.f32 %v119, %v168
    %v180 = vadd.f32 %v122, %v171
    %v181 = vadd.f32 %v125, %v174
    %v182 = vadd.f32 %v128, %v177
    %v183 = vld [vmem:[%s0 + $0x3] sm:$0xff]
    %v184 = vld [vmem:[%s0 + $0xb] sm:$0xff]
    %v185 = vld [vmem:[%s0 + $0x13] sm:$0xff]
    %v186 = vld [vmem:[%s0 + $0x1b] sm:$0xf]
    %v187 = vld [vmem:[%s5 + $0x60] sm:$0xff]
    %v188 = vld [vmem:[%s5 + $0x68] sm:$0xff]
    %v189 = vld [vmem:[%s5 + $0x70] sm:$0xff]
    %v190 = vld [vmem:[%s5 + $0x78] sm:$0xff]
    %v192 = vsel %vm47, %v183, 0
    %v195 = vsel %vm47, %v184, 0
    %v198 = vsel %vm47, %v185, 0
    %v201 = vsel %vm47, %v186, 0
    %203 = vmatpush.msra.mxu0 0.0
    %204 = vmatpush.msra.mxu0 0.0
    %205 = vmatpush.msra.mxu0 0.0
    %206 = vmatpush.msra.mxu0 0.0
    %207 = vmatpush.msra.mxu0 0.0
    %208 = vmatpush.msra.mxu0 0.0
    %209 = vmatpush.msra.mxu0 0.0
    %210 = vmatpush.msra.mxu0 0.0
    %211 = vmatpush.msra.mxu0 0.0
    %212 = vmatpush.msra.mxu0 0.0
    %213 = vmatpush.msra.mxu0 0.0
    %214 = vmatpush.msra.mxu0 0.0
    %215 = vmatpush.msra.mxu0 %v190
    %216 = vmatpush.msra.mxu0 %v189
    %217 = vmatpush.msra.mxu0 %v188
    %218 = vmatpush.msra.mxu0 %v187
    %219 = vmatmul.f32.gmra.mxu0 %v192
    %v220 = vpop.f32.mrf.mxu0
    %v221 = vadd.f32 0.0, %v220
    %222 = vmatmul.f32.gmra.mxu0 %v195
    %v223 = vpop.f32.mrf.mxu0
    %v224 = vadd.f32 0.0, %v223
    %225 = vmatmul.f32.gmra.mxu0 %v198
    %v226 = vpop.f32.mrf.mxu0
    %v227 = vadd.f32 0.0, %v226
    %228 = vmatmul.f32.gmra.mxu0 %v201
    %v229 = vpop.f32.mrf.mxu0
    %v230 = vadd.f32 0.0, %v229
    %231 = vdwg.mxu0
    %v232 = vadd.f32 %v179, %v221
    %v233 = vadd.f32 %v180, %v224
    %v234 = vadd.f32 %v181, %v227
    %v235 = vadd.f32 %v182, %v230
    %v236 = vld [vmem:[%s0 + $0x4] sm:$0xff]
    %v237 = vld [vmem:[%s0 + $0xc] sm:$0xff]
    %v238 = vld [vmem:[%s0 + $0x14] sm:$0xff]
    %v239 = vld [vmem:[%s0 + $0x1c] sm:$0xf]
    %v240 = vld [vmem:[%s5 + $0x80] sm:$0xff]
    %v241 = vld [vmem:[%s5 + $0x88] sm:$0xff]
    %v242 = vld [vmem:[%s5 + $0x90] sm:$0xff]
    %v243 = vld [vmem:[%s5 + $0x98] sm:$0xff]
    %v245 = vsel %vm47, %v236, 0
    %v248 = vsel %vm47, %v237, 0
    %v251 = vsel %vm47, %v238, 0
    %v254 = vsel %vm47, %v239, 0
    %256 = vmatpush.msra.mxu0 0.0
    %257 = vmatpush.msra.mxu0 0.0
    %258 = vmatpush.msra.mxu0 0.0
    %259 = vmatpush.msra.mxu0 0.0
    %260 = vmatpush.msra.mxu0 0.0
    %261 = vmatpush.msra.mxu0 0.0
    %262 = vmatpush.msra.mxu0 0.0
    %263 = vmatpush.msra.mxu0 0.0
    %264 = vmatpush.msra.mxu0 0.0
    %265 = vmatpush.msra.mxu0 0.0
    %266 = vmatpush.msra.mxu0 0.0
    %267 = vmatpush.msra.mxu0 0.0
    %268 = vmatpush.msra.mxu0 %v243
    %269 = vmatpush.msra.mxu0 %v242
    %270 = vmatpush.msra.mxu0 %v241
    %271 = vmatpush.msra.mxu0 %v240
    %272 = vmatmul.f32.gmra.mxu0 %v245
    %v273 = vpop.f32.mrf.mxu0
    %v274 = vadd.f32 0.0, %v273
    %275 = vmatmul.f32.gmra.mxu0 %v248
    %v276 = vpop.f32.mrf.mxu0
    %v277 = vadd.f32 0.0, %v276
    %278 = vmatmul.f32.gmra.mxu0 %v251
    %v279 = vpop.f32.mrf.mxu0
    %v280 = vadd.f32 0.0, %v279
    %281 = vmatmul.f32.gmra.mxu0 %v254
    %v282 = vpop.f32.mrf.mxu0
    %v283 = vadd.f32 0.0, %v282
    %284 = vdwg.mxu0
    %v285 = vadd.f32 %v232, %v274
    %v286 = vadd.f32 %v233, %v277
    %v287 = vadd.f32 %v234, %v280
    %v288 = vadd.f32 %v235, %v283
    %v289 = vld [vmem:[%s5 + $0xa0] sm:$0x1]
    %v290 = vperm.slane %v289, 0
    %v291 = vadd.f32 %v285, %v290
    %v292 = vadd.f32 %v286, %v290
    %v293 = vadd.f32 %v287, %v290
    %v294 = vadd.f32 %v288, %v290
    %v295 = vmax.f32 %v291, 0.0
    %v296 = vmax.f32 %v292, 0.0
    %v297 = vmax.f32 %v293, 0.0
    %v298 = vmax.f32 %v294, 0.0
    %300 = vset.pattern.permute.xlu0 0
    %301 = vperm.xlu0 %300, %v27
    %v302 = vpop.permute.xlu0 %301
    %305 = vset.pattern.permute.xlu0 0
    %306 = vperm.xlu0 %305, %v28
    %v307 = vpop.permute.xlu0 %306
    %310 = vset.pattern.permute.xlu0 0
    %311 = vperm.xlu0 %310, %v29
    %v312 = vpop.permute.xlu0 %311
    %315 = vset.pattern.permute.xlu0 0
    %316 = vperm.xlu0 %315, %v30
    %v317 = vpop.permute.xlu0 %316
    %v319 = vmul.f32 %v295, %v302
    %v320 = vmul.f32 %v296, %v307
    %v321 = vmul.f32 %v297, %v312
    %v322 = vmul.f32 %v298, %v317
    %vm323 = vcmask 392192
    %324 = vst.msk [vmem:[#allocation2 + $0x2] sm:$0xff] %vm323, %v319
    %325 = vst.msk [vmem:[#allocation2 + $0xa] sm:$0xff] %vm323, %v320
    %326 = vst.msk [vmem:[#allocation2 + $0x12] sm:$0xff] %vm323, %v321
    %vm327 = vcmask 388096
    %328 = vst.msk [vmem:[#allocation2 + $0x1a] sm:$0xf] %vm327, %v322
    %v329 = vld [vmem:[#allocation2] sm:$0xff]
    %v330 = vld [vmem:[#allocation2 + $0x8] sm:$0xff]
    %v331 = vld [vmem:[#allocation2 + $0x10] sm:$0xff]
    %v332 = vld [vmem:[#allocation2 + $0x18] sm:$0xf]
    %v333 = vld [vmem:[%s5 + $0xa8] sm:$0xff]
    %v334 = vld [vmem:[%s5 + $0xb0] sm:$0xff]
    %v335 = vld [vmem:[%s5 + $0xb8] sm:$0xff]
    %v336 = vld [vmem:[%s5 + $0xc0] sm:$0xff]
    %v337 = vld [vmem:[%s5 + $0xc8] sm:$0xff]
    %v338 = vld [vmem:[%s5 + $0xd0] sm:$0xff]
    %v339 = vld [vmem:[#allocation2 + $0x1] sm:$0xff]
    %v340 = vld [vmem:[#allocation2 + $0x9] sm:$0xff]
    %v341 = vld [vmem:[#allocation2 + $0x11] sm:$0xff]
    %v342 = vld [vmem:[#allocation2 + $0x19] sm:$0xf]
    %v343 = vld [vmem:[%s5 + $0xd8] sm:$0xff]
    %v344 = vld [vmem:[%s5 + $0xe0] sm:$0xff]
    %v345 = vld [vmem:[%s5 + $0xe8] sm:$0xff]
    %v346 = vld [vmem:[%s5 + $0xf0] sm:$0xff]
    %v347 = vld [vmem:[%s5 + $0xf8] sm:$0xff]
    %v348 = vld [vmem:[%s5 + $0x100] sm:$0xff]
    %v350 = vsel %vm323, %v339, 0
    %v353 = vsel %vm323, %v340, 0
    %v356 = vsel %vm323, %v341, 0
    %v359 = vsel %vm323, %v342, 0
    %361 = vmatpush.msra.mxu0 0.0
    %362 = vmatpush.msra.mxu0 0.0
    %363 = vmatpush.msra.mxu0 0.0
    %364 = vmatpush.msra.mxu0 0.0
    %365 = vmatpush.msra.mxu0 0.0
    %366 = vmatpush.msra.mxu0 0.0
    %367 = vmatpush.msra.mxu0 0.0
    %368 = vmatpush.msra.mxu0 0.0
    %369 = vmatpush.msra.mxu0 0.0
    %370 = vmatpush.msra.mxu0 0.0
    %371 = vmatpush.msra.mxu0 %v348
    %372 = vmatpush.msra.mxu0 %v347
    %373 = vmatpush.msra.mxu0 %v346
    %374 = vmatpush.msra.mxu0 %v345
    %375 = vmatpush.msra.mxu0 %v344
    %376 = vmatpush.msra.mxu0 %v343
    %377 = vmatmul.f32.gmra.mxu0 %v350
    %v378 = vpop.f32.mrf.mxu0
    %v379 = vadd.f32 0.0, %v378
    %380 = vmatmul.f32.gmra.mxu0 %v353
    %v381 = vpop.f32.mrf.mxu0
    %v382 = vadd.f32 0.0, %v381
    %383 = vmatmul.f32.gmra.mxu0 %v356
    %v384 = vpop.f32.mrf.mxu0
    %v385 = vadd.f32 0.0, %v384
    %386 = vmatmul.f32.gmra.mxu0 %v359
    %v387 = vpop.f32.mrf.mxu0
    %v388 = vadd.f32 0.0, %v387
    %389 = vdwg.mxu0
    %v391 = vsel %vm323, %v329, 0
    %v394 = vsel %vm323, %v330, 0
    %v397 = vsel %vm323, %v331, 0
    %v400 = vsel %vm323, %v332, 0
    %402 = vmatpush.msra.mxu0 0.0
    %403 = vmatpush.msra.mxu0 0.0
    %404 = vmatpush.msra.mxu0 0.0
    %405 = vmatpush.msra.mxu0 0.0
    %406 = vmatpush.msra.mxu0 0.0
    %407 = vmatpush.msra.mxu0 0.0
    %408 = vmatpush.msra.mxu0 0.0
    %409 = vmatpush.msra.mxu0 0.0
    %410 = vmatpush.msra.mxu0 0.0
    %411 = vmatpush.msra.mxu0 0.0
    %412 = vmatpush.msra.mxu0 %v338
    %413 = vmatpush.msra.mxu0 %v337
    %414 = vmatpush.msra.mxu0 %v336
    %415 = vmatpush.msra.mxu0 %v335
    %416 = vmatpush.msra.mxu0 %v334
    %417 = vmatpush.msra.mxu0 %v333
    %418 = vmatmul.f32.gmra.mxu0 %v391
    %v419 = vpop.f32.mrf.mxu0
    %v420 = vadd.f32 %v379, %v419
    %421 = vmatmul.f32.gmra.mxu0 %v394
    %v422 = vpop.f32.mrf.mxu0
    %v423 = vadd.f32 %v382, %v422
    %424 = vmatmul.f32.gmra.mxu0 %v397
    %v425 = vpop.f32.mrf.mxu0
    %v426 = vadd.f32 %v385, %v425
    %427 = vmatmul.f32.gmra.mxu0 %v400
    %v428 = vpop.f32.mrf.mxu0
    %v429 = vadd.f32 %v388, %v428
    %430 = vdwg.mxu0
    %v431 = vld [vmem:[#allocation2 + $0x2] sm:$0xff]
    %v432 = vld [vmem:[#allocation2 + $0xa] sm:$0xff]
    %v433 = vld [vmem:[#allocation2 + $0x12] sm:$0xff]
    %v434 = vld [vmem:[#allocation2 + $0x1a] sm:$0xf]
    %v435 = vld [vmem:[%s5 + $0x108] sm:$0xff]
    %v436 = vld [vmem:[%s5 + $0x110] sm:$0xff]
    %v437 = vld [vmem:[%s5 + $0x118] sm:$0xff]
    %v438 = vld [vmem:[%s5 + $0x120] sm:$0xff]
    %v439 = vld [vmem:[%s5 + $0x128] sm:$0xff]
    %v440 = vld [vmem:[%s5 + $0x130] sm:$0xff]
    %v442 = vsel %vm323, %v431, 0
    %v445 = vsel %vm323, %v432, 0
    %v448 = vsel %vm323, %v433, 0
    %v451 = vsel %vm323, %v434, 0
    %453 = vmatpush.msra.mxu0 0.0
    %454 = vmatpush.msra.mxu0 0.0
    %455 = vmatpush.msra.mxu0 0.0
    %456 = vmatpush.msra.mxu0 0.0
    %457 = vmatpush.msra.mxu0 0.0
    %458 = vmatpush.msra.mxu0 0.0
    %459 = vmatpush.msra.mxu0 0.0
    %460 = vmatpush.msra.mxu0 0.0
    %461 = vmatpush.msra.mxu0 0.0
    %462 = vmatpush.msra.mxu0 0.0
    %463 = vmatpush.msra.mxu0 %v440
    %464 = vmatpush.msra.mxu0 %v439
    %465 = vmatpush.msra.mxu0 %v438
    %466 = vmatpush.msra.mxu0 %v437
    %467 = vmatpush.msra.mxu0 %v436
    %468 = vmatpush.msra.mxu0 %v435
    %469 = vmatmul.f32.gmra.mxu0 %v442
    %v470 = vpop.f32.mrf.mxu0
    %v471 = vadd.f32 0.0, %v470
    %472 = vmatmul.f32.gmra.mxu0 %v445
    %v473 = vpop.f32.mrf.mxu0
    %v474 = vadd.f32 0.0, %v473
    %475 = vmatmul.f32.gmra.mxu0 %v448
    %v476 = vpop.f32.mrf.mxu0
    %v477 = vadd.f32 0.0, %v476
    %478 = vmatmul.f32.gmra.mxu0 %v451
    %v479 = vpop.f32.mrf.mxu0
    %v480 = vadd.f32 0.0, %v479
    %481 = vdwg.mxu0
    %v482 = vadd.f32 %v420, %v471
    %v483 = vadd.f32 %v423, %v474
    %v484 = vadd.f32 %v426, %v477
    %v485 = vadd.f32 %v429, %v480
    %v486 = vld [vmem:[#allocation2 + $0x3] sm:$0xff]
    %v487 = vld [vmem:[#allocation2 + $0xb] sm:$0xff]
    %v488 = vld [vmem:[#allocation2 + $0x13] sm:$0xff]
    %v489 = vld [vmem:[#allocation2 + $0x1b] sm:$0xf]
    %v490 = vld [vmem:[%s5 + $0x138] sm:$0xff]
    %v491 = vld [vmem:[%s5 + $0x140] sm:$0xff]
    %v492 = vld [vmem:[%s5 + $0x148] sm:$0xff]
    %v493 = vld [vmem:[%s5 + $0x150] sm:$0xff]
    %v494 = vld [vmem:[%s5 + $0x158] sm:$0xff]
    %v495 = vld [vmem:[%s5 + $0x160] sm:$0xff]
    %v497 = vsel %vm323, %v486, 0
    %v500 = vsel %vm323, %v487, 0
    %v503 = vsel %vm323, %v488, 0
    %v506 = vsel %vm323, %v489, 0
    %508 = vmatpush.msra.mxu0 0.0
    %509 = vmatpush.msra.mxu0 0.0
    %510 = vmatpush.msra.mxu0 0.0
    %511 = vmatpush.msra.mxu0 0.0
    %512 = vmatpush.msra.mxu0 0.0
    %513 = vmatpush.msra.mxu0 0.0
    %514 = vmatpush.msra.mxu0 0.0
    %515 = vmatpush.msra.mxu0 0.0
    %516 = vmatpush.msra.mxu0 0.0
    %517 = vmatpush.msra.mxu0 0.0
    %518 = vmatpush.msra.mxu0 %v495
    %519 = vmatpush.msra.mxu0 %v494
    %520 = vmatpush.msra.mxu0 %v493
    %521 = vmatpush.msra.mxu0 %v492
    %522 = vmatpush.msra.mxu0 %v491
    %523 = vmatpush.msra.mxu0 %v490
    %524 = vmatmul.f32.gmra.mxu0 %v497
    %v525 = vpop.f32.mrf.mxu0
    %v526 = vadd.f32 0.0, %v525
    %527 = vmatmul.f32.gmra.mxu0 %v500
    %v528 = vpop.f32.mrf.mxu0
    %v529 = vadd.f32 0.0, %v528
    %530 = vmatmul.f32.gmra.mxu0 %v503
    %v531 = vpop.f32.mrf.mxu0
    %v532 = vadd.f32 0.0, %v531
    %533 = vmatmul.f32.gmra.mxu0 %v506
    %v534 = vpop.f32.mrf.mxu0
    %v535 = vadd.f32 0.0, %v534
    %536 = vdwg.mxu0
    %v537 = vadd.f32 %v482, %v526
    %v538 = vadd.f32 %v483, %v529
    %v539 = vadd.f32 %v484, %v532
    %v540 = vadd.f32 %v485, %v535
    %v541 = vld [vmem:[#allocation2 + $0x4] sm:$0xff]
    %v542 = vld [vmem:[#allocation2 + $0xc] sm:$0xff]
    %v543 = vld [vmem:[#allocation2 + $0x14] sm:$0xff]
    %v544 = vld [vmem:[#allocation2 + $0x1c] sm:$0xf]
    %v545 = vld [vmem:[%s5 + $0x168] sm:$0xff]
    %v546 = vld [vmem:[%s5 + $0x170] sm:$0xff]
    %v547 = vld [vmem:[%s5 + $0x178] sm:$0xff]
    %v548 = vld [vmem:[%s5 + $0x180] sm:$0xff]
    %v549 = vld [vmem:[%s5 + $0x188] sm:$0xff]
    %v550 = vld [vmem:[%s5 + $0x190] sm:$0xff]
    %v552 = vsel %vm323, %v541, 0
    %v555 = vsel %vm323, %v542, 0
    %v558 = vsel %vm323, %v543, 0
    %v561 = vsel %vm323, %v544, 0
    %563 = vmatpush.msra.mxu0 0.0
    %564 = vmatpush.msra.mxu0 0.0
    %565 = vmatpush.msra.mxu0 0.0
    %566 = vmatpush.msra.mxu0 0.0
    %567 = vmatpush.msra.mxu0 0.0
    %568 = vmatpush.msra.mxu0 0.0
    %569 = vmatpush.msra.mxu0 0.0
    %570 = vmatpush.msra.mxu0 0.0
    %571 = vmatpush.msra.mxu0 0.0
    %572 = vmatpush.msra.mxu0 0.0
    %573 = vmatpush.msra.mxu0 %v550
    %574 = vmatpush.msra.mxu0 %v549
    %575 = vmatpush.msra.mxu0 %v548
    %576 = vmatpush.msra.mxu0 %v547
    %577 = vmatpush.msra.mxu0 %v546
    %578 = vmatpush.msra.mxu0 %v545
    %579 = vmatmul.f32.gmra.mxu0 %v552
    %v580 = vpop.f32.mrf.mxu0
    %v581 = vadd.f32 0.0, %v580
    %582 = vmatmul.f32.gmra.mxu0 %v555
    %v583 = vpop.f32.mrf.mxu0
    %v584 = vadd.f32 0.0, %v583
    %585 = vmatmul.f32.gmra.mxu0 %v558
    %v586 = vpop.f32.mrf.mxu0
    %v587 = vadd.f32 0.0, %v586
    %588 = vmatmul.f32.gmra.mxu0 %v561
    %v589 = vpop.f32.mrf.mxu0
    %v590 = vadd.f32 0.0, %v589
    %591 = vdwg.mxu0
    %v592 = vadd.f32 %v537, %v581
    %v593 = vadd.f32 %v538, %v584
    %v594 = vadd.f32 %v539, %v587
    %v595 = vadd.f32 %v540, %v590
    %v596 = vld [vmem:[%s5 + $0x198] sm:$0x1]
    %v597 = vperm.slane %v596, 0
    %v598 = vadd.f32 %v592, %v597
    %v599 = vadd.f32 %v593, %v597
    %v600 = vadd.f32 %v594, %v597
    %v601 = vadd.f32 %v595, %v597
    %v602 = vmax.f32 %v598, 0.0
    %v603 = vmax.f32 %v599, 0.0
    %v604 = vmax.f32 %v600, 0.0
    %v605 = vmax.f32 %v601, 0.0
    %v606 = vmul.f32 %v602, %v302
    %v607 = vmul.f32 %v603, %v307
    %v608 = vmul.f32 %v604, %v312
    %v609 = vmul.f32 %v605, %v317
    %v610 = vld [vmem:[%s0 + $0x2] sm:$0xff]
    %v611 = vld [vmem:[%s0 + $0xa] sm:$0xff]
    %v612 = vld [vmem:[%s0 + $0x12] sm:$0xff]
    %v613 = vld [vmem:[%s0 + $0x1a] sm:$0xf]
    %v614 = vld [vmem:[%s4] sm:$0xff]
    %v615 = vld [vmem:[%s4 + $0x8] sm:$0xff]
    %v616 = vld [vmem:[%s4 + $0x10] sm:$0xff]
    %v617 = vld [vmem:[%s4 + $0x18] sm:$0xff]
    %v618 = vld [vmem:[%s4 + $0x20] sm:$0xff]
    %v619 = vld [vmem:[%s4 + $0x28] sm:$0xff]
    %v620 = vld [vmem:[%s4 + $0x30] sm:$0xff]
    %v621 = vld [vmem:[%s4 + $0x38] sm:$0xff]
    %v622 = vld [vmem:[%s4 + $0x40] sm:$0xff]
    %v623 = vld [vmem:[%s4 + $0x48] sm:$0xff]
    %v625 = vsel %vm323, %v606, 0
    %v628 = vsel %vm323, %v607, 0
    %v631 = vsel %vm323, %v608, 0
    %v634 = vsel %vm323, %v609, 0
    %636 = vmatpush.msra.mxu0 0.0
    %637 = vmatpush.msra.mxu0 0.0
    %638 = vmatpush.msra.mxu0 0.0
    %639 = vmatpush.msra.mxu0 0.0
    %640 = vmatpush.msra.mxu0 0.0
    %641 = vmatpush.msra.mxu0 0.0
    %642 = vmatpush.msra.mxu0 0.0
    %643 = vmatpush.msra.mxu0 0.0
    %644 = vmatpush.msra.mxu0 0.0
    %645 = vmatpush.msra.mxu0 0.0
    %646 = vmatpush.msra.mxu0 %v623
    %647 = vmatpush.msra.mxu0 %v622
    %648 = vmatpush.msra.mxu0 %v621
    %649 = vmatpush.msra.mxu0 %v620
    %650 = vmatpush.msra.mxu0 %v619
    %651 = vmatpush.msra.mxu0 %v618
    %652 = vmatmul.f32.gmra.mxu0 %v625
    %v653 = vpop.f32.mrf.mxu0
    %v654 = vadd.f32 0.0, %v653
    %655 = vmatmul.f32.gmra.mxu0 %v628
    %v656 = vpop.f32.mrf.mxu0
    %v657 = vadd.f32 0.0, %v656
    %658 = vmatmul.f32.gmra.mxu0 %v631
    %v659 = vpop.f32.mrf.mxu0
    %v660 = vadd.f32 0.0, %v659
    %661 = vmatmul.f32.gmra.mxu0 %v634
    %v662 = vpop.f32.mrf.mxu0
    %v663 = vadd.f32 0.0, %v662
    %664 = vdwg.mxu0
    %v666 = vsel %vm47, %v610, 0
    %v669 = vsel %vm47, %v611, 0
    %v672 = vsel %vm47, %v612, 0
    %v675 = vsel %vm47, %v613, 0
    %677 = vmatpush.msra.mxu0 0.0
    %678 = vmatpush.msra.mxu0 0.0
    %679 = vmatpush.msra.mxu0 0.0
    %680 = vmatpush.msra.mxu0 0.0
    %681 = vmatpush.msra.mxu0 0.0
    %682 = vmatpush.msra.mxu0 0.0
    %683 = vmatpush.msra.mxu0 0.0
    %684 = vmatpush.msra.mxu0 0.0
    %685 = vmatpush.msra.mxu0 0.0
    %686 = vmatpush.msra.mxu0 0.0
    %687 = vmatpush.msra.mxu0 0.0
    %688 = vmatpush.msra.mxu0 0.0
    %689 = vmatpush.msra.mxu0 %v617
    %690 = vmatpush.msra.mxu0 %v616
    %691 = vmatpush.msra.mxu0 %v615
    %692 = vmatpush.msra.mxu0 %v614
    %693 = vmatmul.f32.gmra.mxu0 %v666
    %v694 = vpop.f32.mrf.mxu0
    %v695 = vadd.f32 %v654, %v694
    %696 = vmatmul.f32.gmra.mxu0 %v669
    %v697 = vpop.f32.mrf.mxu0
    %v698 = vadd.f32 %v657, %v697
    %699 = vmatmul.f32.gmra.mxu0 %v672
    %v700 = vpop.f32.mrf.mxu0
    %v701 = vadd.f32 %v660, %v700
    %702 = vmatmul.f32.gmra.mxu0 %v675
    %v703 = vpop.f32.mrf.mxu0
    %v704 = vadd.f32 %v663, %v703
    %705 = vdwg.mxu0
    %v706 = vld [vmem:[%s4 + $0x50] sm:$0x1]
    %v707 = vperm.slane %v706, 0
    %v708 = vadd.f32 %v695, %v707
    %v709 = vadd.f32 %v698, %v707
    %v710 = vadd.f32 %v701, %v707
    %v711 = vadd.f32 %v704, %v707
    %v712 = vmax.f32 %v708, 0.0
    %v713 = vmax.f32 %v709, 0.0
    %v714 = vmax.f32 %v710, 0.0
    %v715 = vmax.f32 %v711, 0.0
    %v716 = vmul.f32 %v712, %v302
    %v717 = vmul.f32 %v713, %v307
    %v718 = vmul.f32 %v714, %v312
    %v719 = vmul.f32 %v715, %v317
    %v720 = vld [vmem:[%s4 + $0x58] sm:$0x1]
    %v721 = vld [vmem:[%s4 + $0x60] sm:$0x1]
    %v722 = vsel %vm47, %v716, 0.0
    %723 = vadd.xlane.f32.xlu0 %v722
    %v724 = vpop.xlane.xlu0 %723
    %v725 = vsel %vm47, %v717, 0.0
    %726 = vadd.xlane.f32.xlu0 %v725
    %v727 = vpop.xlane.xlu0 %726
    %v728 = vsel %vm47, %v718, 0.0
    %729 = vadd.xlane.f32.xlu0 %v728
    %v730 = vpop.xlane.xlu0 %729
    %vm731 = vcmask 257024
    %v732 = vsel %vm731, %v719, 0.0
    %733 = vadd.xlane.f32.xlu0 %v732
    %v734 = vpop.xlane.xlu0 %733
    %v735 = vrcp.pop 32.0
    %v736 = vmul.f32 32.0, %v735
    %v737 = vsub.f32 1.0, %v736
    %v738 = vmul.f32 %v735, %v737
    %v739 = vadd.f32 %v735, %v738
    %vm740 = vweird.f32 %v735
    %v741 = vsel %vm740, %v735, %v739
    %v742 = vmul.f32 %v724, %v741
    %v743 = vmul.f32 %v727, %v741
    %v744 = vmul.f32 %v730, %v741
    %v745 = vmul.f32 %v734, %v741
    %v746 = vsub.f32 %v716, %v742
    %v747 = vsub.f32 %v717, %v743
    %v748 = vsub.f32 %v718, %v744
    %v749 = vsub.f32 %v719, %v745
    %v750 = vmul.f32 %v746, %v746
    %v751 = vmul.f32 %v747, %v747
    %v752 = vmul.f32 %v748, %v748
    %v753 = vmul.f32 %v749, %v749
    %v754 = vsel %vm47, %v750, 0.0
    %755 = vadd.xlane.f32.xlu0 %v754
    %v756 = vpop.xlane.xlu0 %755
    %v757 = vsel %vm47, %v751, 0.0
    %758 = vadd.xlane.f32.xlu0 %v757
    %v759 = vpop.xlane.xlu0 %758
    %v760 = vsel %vm47, %v752, 0.0
    %761 = vadd.xlane.f32.xlu0 %v760
    %v762 = vpop.xlane.xlu0 %761
    %v763 = vsel %vm731, %v753, 0.0
    %764 = vadd.xlane.f32.xlu0 %v763
    %v765 = vpop.xlane.xlu0 %764
    %v766 = vmul.f32 %v756, %v741
    %v767 = vmul.f32 %v759, %v741
    %v768 = vmul.f32 %v762, %v741
    %v769 = vmul.f32 %v765, %v741
    %v770 = vadd.f32 %v766, 1e-05
    %v771 = vadd.f32 %v767, 1e-05
    %v772 = vadd.f32 %v768, 1e-05
    %v773 = vadd.f32 %v769, 1e-05
    %v774 = vrsqrt.pop %v770
    %v775 = vmul.f32 %v774, %v770
    %v776 = vmul.f32 %v775, %v774
    %v777 = vmul.f32 0.5, %v776
    %v778 = vsub.f32 1.5, %v777
    %v779 = vmul.f32 %v774, %v778
    %vm780 = vweird.f32 %v770
    %vm781 = vweird.f32 %v774
    %vm782 = vmor %vm780, %vm781
    %v783 = vsel %vm782, %v774, %v779
    %v784 = vrsqrt.pop %v771
    %v785 = vmul.f32 %v784, %v771
    %v786 = vmul.f32 %v785, %v784
    %v787 = vmul.f32 0.5, %v786
    %v788 = vsub.f32 1.5, %v787
    %v789 = vmul.f32 %v784, %v788
    %vm790 = vweird.f32 %v771
    %vm791 = vweird.f32 %v784
    %vm792 = vmor %vm790, %vm791
    %v793 = vsel %vm792, %v784, %v789
    %v794 = vrsqrt.pop %v772
    %v795 = vmul.f32 %v794, %v772
    %v796 = vmul.f32 %v795, %v794
    %v797 = vmul.f32 0.5, %v796
    %v798 = vsub.f32 1.5, %v797
    %v799 = vmul.f32 %v794, %v798
    %vm800 = vweird.f32 %v772
    %vm801 = vweird.f32 %v794
    %vm802 = vmor %vm800, %vm801
    %v803 = vsel %vm802, %v794, %v799
    %v804 = vrsqrt.pop %v773
    %v805 = vmul.f32 %v804, %v773
    %v806 = vmul.f32 %v805, %v804
    %v807 = vmul.f32 0.5, %v806
    %v808 = vsub.f32 1.5, %v807
    %v809 = vmul.f32 %v804, %v808
    %vm810 = vweird.f32 %v773
    %vm811 = vweird.f32 %v804
    %vm812 = vmor %vm810, %vm811
    %v813 = vsel %vm812, %v804, %v809
    %v814 = vmul.f32 %v746, %v783
    %v815 = vmul.f32 %v747, %v793
    %v816 = vmul.f32 %v748, %v803
    %v817 = vmul.f32 %v749, %v813
    %v818 = vperm.slane %v720, 0
    %v819 = vmul.f32 %v814, %v818
    %v820 = vmul.f32 %v815, %v818
    %v821 = vmul.f32 %v816, %v818
    %v822 = vmul.f32 %v817, %v818
    %v823 = vperm.slane %v721, 0
    %v824 = vadd.f32 %v819, %v823
    %v825 = vadd.f32 %v820, %v823
    %v826 = vadd.f32 %v821, %v823
    %v827 = vadd.f32 %v822, %v823
    %v828 = vld [vmem:[%s3] sm:$0xff]
    %v829 = vld [vmem:[%s3 + $0x8] sm:$0xff]
    %v830 = vld [vmem:[%s3 + $0x10] sm:$0xff]
    %v831 = vld [vmem:[%s3 + $0x18] sm:$0xff]
    %v832 = vld [vmem:[%s3 + $0x20] sm:$0xff]
    %v833 = vld [vmem:[%s3 + $0x28] sm:$0xff]
    %v834 = vld [vmem:[%s3 + $0x30] sm:$0xff]
    %v835 = vld [vmem:[%s3 + $0x38] sm:$0xff]
    %vm840 = vcmask 1046528
    %v841 = vrot.slane %v824, 1
    %v842 = vrot.slane %v825, 1
    %v843 = vsel %vm840, %v841, %v842
    %v844 = vrot.slane %v826, 1
    %v845 = vsel %vm840, %v842, %v844
    %v846 = vrot.slane %v827, 1
    %v847 = vsel %vm840, %v844, %v846
    %v848 = vsel %vm47, %v843, 0
    %v850 = vsel %vm47, %v845, 0
    %v852 = vsel %vm47, %v847, 0
    %v854 = vsel %vm47, %v846, 0
    %856 = vmatpush.msra.mxu0 0.0
    %857 = vmatpush.msra.mxu0 0.0
    %858 = vmatpush.msra.mxu0 0.0
    %859 = vmatpush.msra.mxu0 0.0
    %860 = vmatpush.msra.mxu0 0.0
    %861 = vmatpush.msra.mxu0 0.0
    %862 = vmatpush.msra.mxu0 0.0
    %863 = vmatpush.msra.mxu0 0.0
    %864 = vmatpush.msra.mxu0 0.0
    %865 = vmatpush.msra.mxu0 0.0
    %866 = vmatpush.msra.mxu0 0.0
    %867 = vmatpush.msra.mxu0 0.0
    %868 = vmatpush.msra.mxu0 %v835
    %869 = vmatpush.msra.mxu0 %v834
    %870 = vmatpush.msra.mxu0 %v833
    %871 = vmatpush.msra.mxu0 %v832
    %872 = vmatmul.f32.gmra.mxu0 %v848
    %v873 = vpop.f32.mrf.mxu0
    %v874 = vadd.f32 0.0, %v873
    %875 = vmatmul.f32.gmra.mxu0 %v850
    %v876 = vpop.f32.mrf.mxu0
    %877 = vmatmul.f32.gmra.mxu0 %v852
    %v878 = vpop.f32.mrf.mxu0
    %v879 = vadd.f32 0.0, %v878
    %880 = vmatmul.f32.gmra.mxu0 %v854
    %v881 = vpop.f32.mrf.mxu0
    %882 = vdwg.mxu0
    %v883 = vsel %vm47, %v824, 0
    %v885 = vsel %vm47, %v825, 0
    %v887 = vsel %vm47, %v826, 0
    %v889 = vsel %vm47, %v827, 0
    %891 = vmatpush.msra.mxu0 0.0
    %892 = vmatpush.msra.mxu0 0.0
    %893 = vmatpush.msra.mxu0 0.0
    %894 = vmatpush.msra.mxu0 0.0
    %895 = vmatpush.msra.mxu0 0.0
    %896 = vmatpush.msra.mxu0 0.0
    %897 = vmatpush.msra.mxu0 0.0
    %898 = vmatpush.msra.mxu0 0.0
    %899 = vmatpush.msra.mxu0 0.0
    %900 = vmatpush.msra.mxu0 0.0
    %901 = vmatpush.msra.mxu0 0.0
    %902 = vmatpush.msra.mxu0 0.0
    %903 = vmatpush.msra.mxu0 %v831
    %904 = vmatpush.msra.mxu0 %v830
    %905 = vmatpush.msra.mxu0 %v829
    %906 = vmatpush.msra.mxu0 %v828
    %907 = vmatmul.f32.gmra.mxu0 %v883
    %v908 = vpop.f32.mrf.mxu0
    %v909 = vadd.f32 %v874, %v908
    %910 = vmatmul.f32.gmra.mxu0 %v885
    %v911 = vpop.f32.mrf.mxu0
    %912 = vmatmul.f32.gmra.mxu0 %v887
    %v913 = vpop.f32.mrf.mxu0
    %v914 = vadd.f32 %v879, %v913
    %915 = vmatmul.f32.gmra.mxu0 %v889
    %v916 = vpop.f32.mrf.mxu0
    %917 = vdwg.mxu0
    %v918 = vld [vmem:[%s3 + $0x40] sm:$0x1]
    %v919 = vperm.slane %v918, 0
    %v920 = vadd.f32 %v909, %v919
    %v921 = vadd.f32 %v914, %v919
    %v922 = vmax.f32 %v920, 0.0
    %v923 = vmax.f32 %v921, 0.0
    %vm924 = vcmask 129024
    %v925 = vsel %vm924, %v922, -inf
    %v926 = vrot.slane %v925, 4
    %v927 = vmax.f32 %v925, %v926
    %v928 = vrot.slane %v927, 2
    %v929 = vmax.f32 %v927, %v928
    %v930 = vrot.slane %v929, 1
    %v931 = vmax.f32 %v929, %v930
    %v932 = vsel %vm924, %v923, -inf
    %v933 = vrot.slane %v932, 4
    %v934 = vmax.f32 %v932, %v933
    %v935 = vrot.slane %v934, 2
    %v936 = vmax.f32 %v934, %v935
    %v937 = vrot.slane %v936, 1
    %v938 = vmax.f32 %v936, %v937
    %vm939 = vcmask 1040384
    %v940 = vsel %vm939, %v931, %v938
    %v941 = vld [vmem:[%s3 + $0x48] sm:$0xff]
    %v942 = vld [vmem:[%s3 + $0x50] sm:$0xff]
    %v943 = vld [vmem:[%s3 + $0x58] sm:$0xff]
    %v944 = vld [vmem:[%s3 + $0x60] sm:$0xff]
    %v945 = vld [vmem:[%s3 + $0x68] sm:$0xff]
    %v946 = vld [vmem:[%s3 + $0x70] sm:$0xff]
    %v947 = vld [vmem:[%s3 + $0x78] sm:$0xff]
    %v948 = vld [vmem:[%s3 + $0x80] sm:$0xff]
    %949 = vmatpush.msra.mxu0 0.0
    %950 = vmatpush.msra.mxu0 0.0
    %951 = vmatpush.msra.mxu0 0.0
    %952 = vmatpush.msra.mxu0 0.0
    %953 = vmatpush.msra.mxu0 0.0
    %954 = vmatpush.msra.mxu0 0.0
    %955 = vmatpush.msra.mxu0 0.0
    %956 = vmatpush.msra.mxu0 0.0
    %957 = vmatpush.msra.mxu0 0.0
    %958 = vmatpush.msra.mxu0 0.0
    %959 = vmatpush.msra.mxu0 0.0
    %960 = vmatpush.msra.mxu0 0.0
    %961 = vmatpush.msra.mxu0 %v948
    %962 = vmatpush.msra.mxu0 %v947
    %963 = vmatpush.msra.mxu0 %v946
    %964 = vmatpush.msra.mxu0 %v945
    %965 = vmatmul.f32.gmra.mxu0 %v848
    %v966 = vpop.f32.mrf.mxu0
    %v967 = vadd.f32 0.0, %v966
    %968 = vmatmul.f32.gmra.mxu0 %v850
    %v969 = vpop.f32.mrf.mxu0
    %970 = vmatmul.f32.gmra.mxu0 %v852
    %v971 = vpop.f32.mrf.mxu0
    %v972 = vadd.f32 0.0, %v971
    %973 = vmatmul.f32.gmra.mxu0 %v854
    %v974 = vpop.f32.mrf.mxu0
    %975 = vdwg.mxu0
    %976 = vmatpush.msra.mxu0 0.0
    %977 = vmatpush.msra.mxu0 0.0
    %978 = vmatpush.msra.mxu0 0.0
    %979 = vmatpush.msra.mxu0 0.0
    %980 = vmatpush.msra.mxu0 0.0
    %981 = vmatpush.msra.mxu0 0.0
    %982 = vmatpush.msra.mxu0 0.0
    %983 = vmatpush.msra.mxu0 0.0
    %984 = vmatpush.msra.mxu0 0.0
    %985 = vmatpush.msra.mxu0 0.0
    %986 = vmatpush.msra.mxu0 0.0
    %987 = vmatpush.msra.mxu0 0.0
    %988 = vmatpush.msra.mxu0 %v944
    %989 = vmatpush.msra.mxu0 %v943
    %990 = vmatpush.msra.mxu0 %v942
    %991 = vmatpush.msra.mxu0 %v941
    %992 = vmatmul.f32.gmra.mxu0 %v883
    %v993 = vpop.f32.mrf.mxu0
    %v994 = vadd.f32 %v967, %v993
    %995 = vmatmul.f32.gmra.mxu0 %v885
    %v996 = vpop.f32.mrf.mxu0
    %997 = vmatmul.f32.gmra.mxu0 %v887
    %v998 = vpop.f32.mrf.mxu0
    %v999 = vadd.f32 %v972, %v998
    %1000 = vmatmul.f32.gmra.mxu0 %v889
    %v1001 = vpop.f32.mrf.mxu0
    %1002 = vdwg.mxu0
    %v1003 = vld [vmem:[%s3 + $0x88] sm:$0xff]
    %v1004 = vld [vmem:[%s3 + $0x90] sm:$0xff]
    %v1005 = vld [vmem:[%s3 + $0x98] sm:$0xff]
    %v1006 = vld [vmem:[%s3 + $0xa0] sm:$0xff]
    %vm1007 = vcmask 1045504
    %v1008 = vrot.slane %v824, 2
    %v1009 = vrot.slane %v825, 2
    %v1010 = vsel %vm1007, %v1008, %v1009
    %v1011 = vrot.slane %v826, 2
    %v1012 = vsel %vm1007, %v1009, %v1011
    %v1013 = vrot.slane %v827, 2
    %v1014 = vsel %vm1007, %v1011, %v1013
    %v1015 = vsel %vm47, %v1010, 0
    %v1017 = vsel %vm47, %v1012, 0
    %v1019 = vsel %vm47, %v1014, 0
    %v1021 = vsel %vm47, %v1013, 0
    %1023 = vmatpush.msra.mxu0 0.0
    %1024 = vmatpush.msra.mxu0 0.0
    %1025 = vmatpush.msra.mxu0 0.0
    %1026 = vmatpush.msra.mxu0 0.0
    %1027 = vmatpush.msra.mxu0 0.0
    %1028 = vmatpush.msra.mxu0 0.0
    %1029 = vmatpush.msra.mxu0 0.0
    %1030 = vmatpush.msra.mxu0 0.0
    %1031 = vmatpush.msra.mxu0 0.0
    %1032 = vmatpush.msra.mxu0 0.0
    %1033 = vmatpush.msra.mxu0 0.0
    %1034 = vmatpush.msra.mxu0 0.0
    %1035 = vmatpush.msra.mxu0 %v1006
    %1036 = vmatpush.msra.mxu0 %v1005
    %1037 = vmatpush.msra.mxu0 %v1004
    %1038 = vmatpush.msra.mxu0 %v1003
    %1039 = vmatmul.f32.gmra.mxu0 %v1015
    %v1040 = vpop.f32.mrf.mxu0
    %v1041 = vadd.f32 0.0, %v1040
    %1042 = vmatmul.f32.gmra.mxu0 %v1017
    %v1043 = vpop.f32.mrf.mxu0
    %1044 = vmatmul.f32.gmra.mxu0 %v1019
    %v1045 = vpop.f32.mrf.mxu0
    %v1046 = vadd.f32 0.0, %v1045
    %1047 = vmatmul.f32.gmra.mxu0 %v1021
    %v1048 = vpop.f32.mrf.mxu0
    %1049 = vdwg.mxu0
    %v1050 = vadd.f32 %v994, %v1041
    %v1051 = vadd.f32 %v999, %v1046
    %v1052 = vld [vmem:[%s3 + $0xa8] sm:$0x1]
    %v1053 = vperm.slane %v1052, 0
    %v1054 = vadd.f32 %v1050, %v1053
    %v1055 = vadd.f32 %v1051, %v1053
    %v1056 = vmax.f32 %v1054, 0.0
    %v1057 = vmax.f32 %v1055, 0.0
    %vm1058 = vcmask 128000
    %v1059 = vsel %vm1058, %v1056, -inf
    %v1060 = vrot.slane %v1059, 4
    %v1061 = vmax.f32 %v1059, %v1060
    %v1062 = vrot.slane %v1061, 2
    %v1063 = vmax.f32 %v1061, %v1062
    %v1064 = vrot.slane %v1063, 1
    %v1065 = vmax.f32 %v1063, %v1064
    %v1066 = vsel %vm1058, %v1057, -inf
    %v1067 = vrot.slane %v1066, 4
    %v1068 = vmax.f32 %v1066, %v1067
    %v1069 = vrot.slane %v1068, 2
    %v1070 = vmax.f32 %v1068, %v1069
    %v1071 = vrot.slane %v1070, 1
    %v1072 = vmax.f32 %v1070, %v1071
    %v1073 = vsel %vm939, %v1065, %v1072
    %1075 = vrot.lane.b32.xlu0 %v1073, 16
    %v1076 = vpop.permute.xlu0 %1075
    %vm1078 = vcmask 130048
    %v1079 = vsel %vm1078, %v940, %v1076
    %v1080 = vld [vmem:[%s4 + $0x68] sm:$0x1]
    %v1081 = vld [vmem:[%s4 + $0x70] sm:$0x1]
    %vm1082 = vcmask 254976
    %v1083 = vsel %vm1082, %v1079, 0.0
    %1084 = vadd.xlane.f32.xlu0 %v1083
    %v1085 = vpop.xlane.xlu0 %1084
    %v1086 = vmul.f32 %v1085, %v741
    %v1087 = vsub.f32 %v1079, %v1086
    %v1088 = vmul.f32 %v1087, %v1087
    %v1089 = vsel %vm1082, %v1088, 0.0
    %1090 = vadd.xlane.f32.xlu0 %v1089
    %v1091 = vpop.xlane.xlu0 %1090
    %v1092 = vmul.f32 %v1091, %v741
    %v1093 = vadd.f32 %v1092, 1e-05
    %v1094 = vrsqrt.pop %v1093
    %v1095 = vmul.f32 %v1094, %v1093
    %v1096 = vmul.f32 %v1095, %v1094
    %v1097 = vmul.f32 0.5, %v1096
    %v1098 = vsub.f32 1.5, %v1097
    %v1099 = vmul.f32 %v1094, %v1098
    %vm1100 = vweird.f32 %v1093
    %vm1101 = vweird.f32 %v1094
    %vm1102 = vmor %vm1100, %vm1101
    %v1103 = vsel %vm1102, %v1094, %v1099
    %v1104 = vmul.f32 %v1087, %v1103
    %v1105 = vperm.slane %v1080, 0
    %v1106 = vmul.f32 %v1104, %v1105
    %v1107 = vperm.slane %v1081, 0
    %v1108 = vadd.f32 %v1106, %v1107
    %v1109 = vld [vmem:[%s2] sm:$0xff]
    %v1110 = vld [vmem:[%s2 + $0x8] sm:$0xff]
    %v1111 = vld [vmem:[%s2 + $0x10] sm:$0xff]
    %v1112 = vld [vmem:[%s2 + $0x18] sm:$0xff]
    %v1113 = vld [vmem:[%s2 + $0x20] sm:$0x1]
    %v1114 = vperm.slane %v1113, 0
    %v1116 = vsel %vm47, %v1108, 0
    %1118 = vmatpush.msra.mxu0 0.0
    %1119 = vmatpush.msra.mxu0 0.0
    %1120 = vmatpush.msra.mxu0 0.0
    %1121 = vmatpush.msra.mxu0 0.0
    %1122 = vmatpush.msra.mxu0 0.0
    %1123 = vmatpush.msra.mxu0 0.0
    %1124 = vmatpush.msra.mxu0 0.0
    %1125 = vmatpush.msra.mxu0 0.0
    %1126 = vmatpush.msra.mxu0 0.0
    %1127 = vmatpush.msra.mxu0 0.0
    %1128 = vmatpush.msra.mxu0 0.0
    %1129 = vmatpush.msra.mxu0 0.0
    %1130 = vmatpush.msra.mxu0 %v1112
    %1131 = vmatpush.msra.mxu0 %v1111
    %1132 = vmatpush.msra.mxu0 %v1110
    %1133 = vmatpush.msra.mxu0 %v1109
    %1134 = vmatmul.f32.gmra.mxu0 %v1116
    %v1135 = vpop.f32.mrf.mxu0
    %v1136 = vadd.f32 %v1114, %v1135
    %1137 = vdwg.mxu0
    %vm1138 = vcmask 25600
    %1139 = vst.msk [vmem:[#allocation3] sm:$0x3] %vm1138, %v1136
    // Predicated region
    $region26: #{_lambda_.1} parent=1 // pred_check
      _
    $region27: #{_lambda_.1} parent=1 // pred_check_branch
      %1141 = sbr.rel (0) target = $region29
    $region28: #{_lambda_.1} parent=1 // pred_region
      %1143 = vsyncadd [#allocation4], 0
      %s1145 = sshll.u32 [#allocation3], 4
      %s1146 = int_to_ptr.vmem [resolvable:$true] %s1145
      %s1147 = sshll.u32 %s6, 4
      %s1148 = int_to_ptr.hbm [resolvable:$true] %s1147
      %1150 = dma.vmem_to_hbm [thread:$0]  %s1146, 32, %s1148, [#allocation4]
    $region29: #{_lambda_.1} parent=1 // pred_fallthru
      _
    // Predicated region
    $region30: #{_lambda_.1} parent=1 // pred_check
      _
    $region31: #{_lambda_.1} parent=1 // pred_check_branch
      %1152 = sbr.rel (0) target = $region33
    $region32: #{_lambda_.1} parent=1 // pred_region
      %1154 = dma.done [#allocation4], 32
    $region33: #{_lambda_.1} parent=1 // pred_fallthru
      _
    %1155 = vsyncpa [#allocation4], 1

</llo_original>
